<compile_context>
chip_gen: v6e
topology: v6e:2x2x1
jax: 0.10.0
libtpu: 0.0.40
codegen_flags: <defaults>
</compile_context>

<pallas_src>
import functools
import math

import numpy as np
import jax
import jax.numpy as jnp
from jax import lax
from jax.experimental import pallas as pl
from jax.experimental.pallas import tpu as pltpu

EPS = 1e-5
DECAY = 0.9


def _vmem():
    # whole-array block resident in VMEM (all shapes here are tiny)
    return pl.BlockSpec(memory_space=pltpu.MemorySpace.VMEM)


def _gelu(x):
    # tanh-approximate GELU: the heavy part rides the EUP slot instead of a long
    # VALU erf polynomial.  ~1e-3 relative delta vs torch.nn.GELU() exact erf.
    c = math.sqrt(2.0 / math.pi)
    return 0.5 * x * (1.0 + jnp.tanh(c * (x + 0.044715 * x * x * x)))


# ----------------------------------------------------------------------------
# Kernel 1: RevIN norm + U-Net (down linears + decay + pooling-matmul + up
# linears) + forward real-DFT (folded into the stage-0 shared-K matmul).
# All work is in row layout [R, time] with R = B*C, lane axis = time.
# ----------------------------------------------------------------------------
def make_unet_kernel(stage_num, two_f):
    n_down = stage_num
    n_up = stage_num - 1
    n_in = 4 + 2 * n_down + 3 * n_up

    def kernel(*refs):
        in_refs = refs[:n_in]
        xn_ref, spec_ref, e_ref, sc_ref, sh_ref = refs[n_in:]
        x_ref, rw_ref, rb_ref, dec_ref = in_refs[:4]
        d_refs = in_refs[4:4 + 2 * n_down]
        u_refs = in_refs[4 + 2 * n_down:]

        x = x_ref[...]                                    # [R, L]
        rw = rw_ref[...]                                  # [R, 1]
        rb = rb_ref[...]                                  # [R, 1]

        # RevIN 'norm' (stats over time, unbiased=False), affine applied.
        mu = jnp.mean(x, axis=1, keepdims=True)
        var = jnp.mean((x - mu) ** 2, axis=1, keepdims=True)
        inv_std = lax.rsqrt(var + EPS)
        xn = (x - mu) * inv_std * rw + rb
        xn_ref[...] = xn

        # RevIN 'denorm' folded to one FMA for the head kernel: y*scale + shift
        std = (var + EPS) * inv_std                       # sqrt(var+eps)
        scale = std / (rw + EPS * EPS)
        shift = mu - rb * scale
        sc_ref[...] = scale
        sh_ref[...] = shift

        decay = dec_ref[...]                              # [R, 1] = 0.9**channel

        # Down stages.  Each stage does ONE fused dot:
        #   cur @ [W_i^T | PoolMat_i | (DFT for i==0)]
        #   -> first cols = block_model linear, next cols = 2*AvgPool1d (decay
        #      commutes with pooling: it is per-row), last cols (stage 0 only)
        #      = the rfft of the normalised input as [Re | Im].
        cur = xn
        e_out = []
        for i in range(n_down):
            w = d_refs[2 * i][...]                        # [L_i, out_i (+pool)(+2F)]
            b = d_refs[2 * i + 1][...]                    # [1, out_i]
            out_i = b.shape[-1]
            dft_cols = two_f if i == 0 else 0
            pool_cols = w.shape[-1] - out_i - dft_cols
            y = jnp.dot(cur, w, preferred_element_type=jnp.float32)
            e_out.append(y[:, :out_i] + b)
            if i == 0:
                spec_ref[...] = y[:, out_i + pool_cols:]  # [R, 2F] = [Re | Im]
            if i < n_down - 1:
                cur = decay * y[:, out_i:out_i + pool_cols]

        # Up stages: cat(e_prev, e_last) @ W  ==  e_prev @ Wa + e_last @ Wb
        e_last = e_out[n_down - 1]
        for i in range(n_up):
            wa = u_refs[3 * i][...]
            wb = u_refs[3 * i + 1][...]
            bu = u_refs[3 * i + 2][...]
            e_prev = e_out[n_down - i - 2]
            e_last = (jnp.dot(e_prev, wa, preferred_element_type=jnp.float32)
                      + jnp.dot(e_last, wb, preferred_element_type=jnp.float32)
                      + bu)
        e_ref[...] = e_last

    return kernel


def unet_forward(prep, x_rows, cfg):
    R, L = x_rows.shape
    stage_num = cfg['stage_num']
    P = cfg['pred_len']
    two_f = prep['idft'].shape[0]

    inputs = [x_rows, prep['rw_rows'], prep['rb_rows'], prep['decay_rows']]
    for wcat, b in prep['down']:
        inputs += [wcat, b]
    for wa, wb, bu in prep['up']:
        inputs += [wa, wb, bu]

    out_shape = (jax.ShapeDtypeStruct((R, L), jnp.float32),      # x_norm
                 jax.ShapeDtypeStruct((R, two_f), jnp.float32),  # rfft [Re | Im]
                 jax.ShapeDtypeStruct((R, P), jnp.float32),      # e_last (U-Net)
                 jax.ShapeDtypeStruct((R, 1), jnp.float32),      # denorm scale
                 jax.ShapeDtypeStruct((R, 1), jnp.float32))      # denorm shift
    return pl.pallas_call(
        make_unet_kernel(stage_num, two_f),
        out_shape=out_shape,
        in_specs=[_vmem()] * len(inputs),
        out_specs=tuple(_vmem() for _ in out_shape),
    )(*inputs)


# ----------------------------------------------------------------------------
# Kernel 2: filtered inverse real-DFT + MLPBlock + multiply with U-Net branch
# + RevIN denorm (all fused).
# ----------------------------------------------------------------------------
def head_kernel(xn_ref, spec_ref, keep_ref, e_ref, sc_ref, sh_ref,
                idft_ref, w123_ref, b1_ref, b2_ref, bj_ref, wc_ref, bc_ref,
                lnw_ref, lnb_ref, o_ref):
    H = b1_ref.shape[-1]
    # RFFTM reconstruction: mask the spectrum and do irfft as ONE MXU matmul,
    # then multiply with the normalised input (jump_net = Identity).
    x_rec = jnp.dot(spec_ref[...] * keep_ref[...], idft_ref[...],
                    preferred_element_type=jnp.float32)          # [R, L]
    lin = xn_ref[...] * x_rec                                    # [R, L]
    # branch1 / branch2 / jump share K=L -> one batched MXU pass.
    z = jnp.dot(lin, w123_ref[...], preferred_element_type=jnp.float32)  # [R,2H+P]
    h1 = _gelu(z[:, :H] + b1_ref[...])
    h2 = z[:, H:2 * H] + b2_ref[...]
    jump = z[:, 2 * H:] + bj_ref[...]
    c = _gelu(jnp.dot(h1 * h2, wc_ref[...], preferred_element_type=jnp.float32)
              + bc_ref[...])
    # LayerNorm(out_features)
    mu = jnp.mean(c, axis=-1, keepdims=True)
    var = jnp.mean((c - mu) ** 2, axis=-1, keepdims=True)
    c = (c - mu) * lax.rsqrt(var + EPS) * lnw_ref[...] + lnb_ref[...]
    mlp_out = jump + c
    # dec_out * linear_out, then RevIN denorm as a single FMA per element.
    o_ref[...] = (e_ref[...] * mlp_out) * sc_ref[...] + sh_ref[...]


def head_forward(prep, xn, spec, keep2, e_last, scale, shift):
    R = xn.shape[0]
    m = prep['mlp']
    P = m['bj'].shape[-1]
    inputs = (xn, spec, keep2, e_last, scale, shift, prep['idft'],
              m['w123'], m['b1'], m['b2'], m['bj'], m['wct'], m['bc'],
              m['lnw'], m['lnb'])
    return pl.pallas_call(
        head_kernel,
        out_shape=jax.ShapeDtypeStruct((R, P), jnp.float32),
        in_specs=[_vmem()] * len(inputs),
        out_specs=_vmem(),
    )(*inputs)


# ----------------------------------------------------------------------------
# RFFTM keep-mask: energy-based frequency selection.
# TODO(synk): the data-dependent top-k selection (cumsum / searchsorted /
#             argsort over F = L//2+1 energies) has no clean Pallas TPU
#             equivalent; it stays in plain JAX (O(F) work on ~9 scalars).
# ----------------------------------------------------------------------------
def rfftm_keep_mask(spec, energy_threshold_param):
    n_freq = spec.shape[-1] // 2
    xr, xi = spec[:, :n_freq], spec[:, n_freq:]
    energy = jnp.mean(xr * xr + xi * xi, axis=0)              # mean over all (b, c)
    cum = jnp.cumsum(energy / jnp.sum(energy))
    thr = 0.95 + 0.1 * jax.nn.sigmoid(energy_threshold_param)
    k = jnp.minimum(jnp.searchsorted(cum, thr) + 1, n_freq)
    order = jnp.argsort(-energy)
    rank = jnp.zeros((n_freq,), jnp.int32).at[order].set(
        jnp.arange(n_freq, dtype=jnp.int32))
    keep = (rank < k).astype(spec.dtype)
    return jnp.concatenate([keep, keep])[None, :]              # [1, 2F]


# ----------------------------------------------------------------------------
# Constant matrices: forward/inverse real-DFT and pooling, baked for the MXU.
# ----------------------------------------------------------------------------
def make_dft_matrices(seq_len):
    L = seq_len
    F = L // 2 + 1
    t = np.arange(L, dtype=np.float64)[:, None]
    f = np.arange(F, dtype=np.float64)[None, :]
    ang = 2.0 * np.pi * t * f / L                              # [L, F]
    cr = np.cos(ang)
    ci = -np.sin(ang)
    dft = np.concatenate([cr, ci], axis=1).astype(np.float32)  # [L, 2F]: x@dft=[Re|Im]
    w = np.full((F,), 2.0)
    w[0] = 1.0
    if L % 2 == 0:
        w[-1] = 1.0                                            # Nyquist bin weight
    icr = (w[None, :] * np.cos(ang)).T / L                     # [F, L]
    ici = (-(w[None, :]) * np.sin(ang)).T / L                  # [F, L]
    idft = np.concatenate([icr, ici], axis=0).astype(np.float32)  # [2F, L]
    return jnp.asarray(dft), jnp.asarray(idft)


def compute_stage_lens(cfg):
    len_in, len_out = cfg['seq_len'], cfg['pred_len']
    down_in, down_out = [len_in], [len_out]
    k, s, p = cfg['stage_pool_kernel'], cfg['stage_pool_stride'], cfg['stage_pool_padding']
    for _ in range(cfg['stage_num'] - 1):
        len_in = (len_in + 2 * p - k) // s + 1
        len_out = (len_out + 2 * p - k) // s + 1
        down_in.append(len_in)
        down_out.append(len_out)
    return down_in, down_out


def make_pool_matrix(l_in, kernel, stride, pad):
    # 2 * AvgPool1d(kernel, stride, pad, count_include_pad=True) as [l_in, l_out]
    # matrix so it fuses into the same MXU dot as the stage linear.
    l_out = (l_in + 2 * pad - kernel) // stride + 1
    m = np.zeros((l_in, l_out), np.float32)
    for j in range(l_out):
        start = j * stride - pad
        for t in range(kernel):
            idx = start + t
            if 0 <= idx < l_in:
                m[idx, j] += 2.0 / kernel
    return jnp.asarray(m)


def init_linear(key, in_f, out_f):
    kw, kb = jax.random.split(key)
    bound = float(in_f) ** -0.5
    w = jax.random.uniform(kw, (out_f, in_f), jnp.float32, -bound, bound)
    b = jax.random.uniform(kb, (out_f,), jnp.float32, -bound, bound)
    return w, b


def init_params(key, cfg):
    down_in, down_out = compute_stage_lens(cfg)
    C, L, P, H = cfg['enc_in'], cfg['seq_len'], cfg['pred_len'], 128
    keys = iter(jax.random.split(key, 32))
    p = {
        'revin_w': jnp.ones((C,), jnp.float32),
        'revin_b': jnp.zeros((C,), jnp.float32),
        'rfftm_thr': jnp.float32(0.0),
        'down': [init_linear(next(keys), i, o) for i, o in zip(down_in, down_out)],
    }
    n = len(down_out)
    p['up'] = [init_linear(next(keys), down_out[n - i - 1] + down_out[n - i - 2],
                           down_out[n - i - 2]) for i in range(n - 1)]
    w1, b1 = init_linear(next(keys), L, H)
    w2, b2 = init_linear(next(keys), L, H)
    wc, bc = init_linear(next(keys), H, P)
    wj, bj = init_linear(next(keys), L, P)
    p['mlp'] = dict(w1=w1, b1=b1, w2=w2, b2=b2, wc=wc, bc=bc,
                    lnw=jnp.ones((P,), jnp.float32), lnb=jnp.zeros((P,), jnp.float32),
                    wj=wj, bj=bj)
    return p


def prepare_params(params, cfg, batch):
    """One-time prep: pre-transpose weights to [in, out], batch shared-K weights,
    bake pooling / padding / DFT into matrices, expand per-channel vectors to
    per-row vectors."""
    C = cfg['enc_in']
    stage_num = cfg['stage_num']
    k, s, pd = cfg['stage_pool_kernel'], cfg['stage_pool_stride'], cfg['stage_pool_padding']
    down_in, down_out = compute_stage_lens(cfg)
    R = batch * C
    dft, idft = make_dft_matrices(cfg['seq_len'])

    prep = {
        'rw_rows': jnp.tile(params['revin_w'], batch).reshape(R, 1),
        'rb_rows': jnp.tile(params['revin_b'], batch).reshape(R, 1),
        'decay_rows': jnp.tile(DECAY ** jnp.arange(C, dtype=jnp.float32),
                               batch).reshape(R, 1),
        'rfftm_thr': params['rfftm_thr'],
        'idft': idft,
    }

    down = []
    for i in range(stage_num):
        w, b = params['down'][i]                 # PyTorch layout [out, in]
        wt = w.T                                 # [in, out] -> no in-kernel .T
        if i < stage_num - 1:
            wt = jnp.concatenate([wt, make_pool_matrix(down_in[i], k, s, pd)], axis=1)
        if i == 0:
            wt = jnp.concatenate([wt, dft], axis=1)   # fold rfft into stage-0 dot
        down.append((wt, b.reshape(1, -1)))
    prep['down'] = down

    ups = []
    n = stage_num
    for i in range(n - 1):
        w, b = params['up'][i]                   # [out, in1+in2]
        in1 = down_out[n - i - 2]
        wt = w.T
        ups.append((wt[:in1], wt[in1:], b.reshape(1, -1)))
    prep['up'] = ups

    m = params['mlp']
    prep['mlp'] = dict(
        w123=jnp.concatenate([m['w1'].T, m['w2'].T, m['wj'].T], axis=1),  # [L, 2H+P]
        b1=m['b1'].reshape(1, -1), b2=m['b2'].reshape(1, -1), bj=m['bj'].reshape(1, -1),
        wct=m['wc'].T, bc=m['bc'].reshape(1, -1),
        lnw=m['lnw'].reshape(1, -1), lnb=m['lnb'].reshape(1, -1))
    return prep


# ----------------------------------------------------------------------------
# Forward
# ----------------------------------------------------------------------------
def model_forward(prep, x_enc, cfg):
    B, L, C = x_enc.shape
    R = B * C
    # single layout change up-front: [B, L, C] -> rows [B*C, L] (lane axis = time)
    x_rows = jnp.transpose(x_enc, (0, 2, 1)).reshape(R, L)

    xn, spec, e_last, scale, shift = unet_forward(prep, x_rows, cfg)
    keep2 = rfftm_keep_mask(spec, prep['rfftm_thr'])               # [1, 2F]
    out_rows = head_forward(prep, xn, spec, keep2, e_last, scale, shift)  # [R, P]

    P = out_rows.shape[-1]
    # single layout change at the end: rows -> [B, pred_len, C]
    return jnp.transpose(out_rows.reshape(B, C, P), (0, 2, 1))


if __name__ == "__main__":
    cfg = dict(seq_len=16, pred_len=8, enc_in=4, stage_num=2,
               stage_pool_kernel=2, stage_pool_stride=2, stage_pool_padding=0,
               individual=False)

    key = jax.random.PRNGKey(0)
    kx, kp = jax.random.split(key)
    params = init_params(kp, cfg)

    B = 2
    prep = prepare_params(params, cfg, B)
    x_enc = jax.random.normal(kx, (B, cfg['seq_len'], cfg['enc_in']), jnp.float32)

    fwd = jax.jit(functools.partial(model_forward, cfg=cfg))
    out = fwd(prep, x_enc)
    out = jax.block_until_ready(out)

    assert out.shape == (B, cfg['pred_len'], cfg['enc_in'])
    assert bool(jnp.all(jnp.isfinite(out)))
    print("KERNEL_OK")
</pallas_src>

<mosaic_0001>
module attributes {stable_mosaic.version = 11 : i64} {
  func.func @kernel(%arg0: memref<8x16xf32, #tpu.memory_space<vmem>>, %arg1: memref<8x1xf32, #tpu.memory_space<vmem>>, %arg2: memref<8x1xf32, #tpu.memory_space<vmem>>, %arg3: memref<8x1xf32, #tpu.memory_space<vmem>>, %arg4: memref<16x34xf32, #tpu.memory_space<vmem>>, %arg5: memref<1x8xf32, #tpu.memory_space<vmem>>, %arg6: memref<8x4xf32, #tpu.memory_space<vmem>>, %arg7: memref<1x4xf32, #tpu.memory_space<vmem>>, %arg8: memref<8x8xf32, #tpu.memory_space<vmem>>, %arg9: memref<4x8xf32, #tpu.memory_space<vmem>>, %arg10: memref<1x8xf32, #tpu.memory_space<vmem>>, %arg11: memref<8x16xf32, #tpu.memory_space<vmem>>, %arg12: memref<8x18xf32, #tpu.memory_space<vmem>>, %arg13: memref<8x8xf32, #tpu.memory_space<vmem>>, %arg14: memref<8x1xf32, #tpu.memory_space<vmem>>, %arg15: memref<8x1xf32, #tpu.memory_space<vmem>>) attributes {dimension_semantics = [], scalar_prefetch = 0 : i64, scratch_operands = 0 : i64, tpu.core_type = #tpu.core_type<tc>} {
    %c0 = arith.constant 0 : index
    %c0_0 = arith.constant 0 : index
    %0 = vector.load %arg0[%c0, %c0_0] : memref<8x16xf32, #tpu.memory_space<vmem>>, vector<8x16xf32>
    %c0_1 = arith.constant 0 : index
    %c0_2 = arith.constant 0 : index
    %1 = vector.load %arg1[%c0_1, %c0_2] : memref<8x1xf32, #tpu.memory_space<vmem>>, vector<8x1xf32>
    %c0_3 = arith.constant 0 : index
    %c0_4 = arith.constant 0 : index
    %2 = vector.load %arg2[%c0_3, %c0_4] : memref<8x1xf32, #tpu.memory_space<vmem>>, vector<8x1xf32>
    %cst = arith.constant dense<0.000000e+00> : vector<8xf32>
    %3 = vector.multi_reduction <add>, %0, %cst [1] : vector<8x16xf32> to vector<8xf32>
    %4 = vector.shape_cast %3 : vector<8xf32> to vector<8x1xf32>
    %cst_5 = arith.constant 1.600000e+01 : f32
    %5 = vector.broadcast %cst_5 : f32 to vector<8x1xf32>
    %6 = arith.divf %4, %5 : vector<8x1xf32>
    %7 = vector.broadcast %6 : vector<8x1xf32> to vector<8x16xf32>
    %8 = arith.subf %0, %7 : vector<8x16xf32>
    %9 = arith.mulf %8, %8 : vector<8x16xf32>
    %cst_6 = arith.constant dense<0.000000e+00> : vector<8xf32>
    %10 = vector.multi_reduction <add>, %9, %cst_6 [1] : vector<8x16xf32> to vector<8xf32>
    %11 = vector.shape_cast %10 : vector<8xf32> to vector<8x1xf32>
    %cst_7 = arith.constant 1.600000e+01 : f32
    %12 = vector.broadcast %cst_7 : f32 to vector<8x1xf32>
    %13 = arith.divf %11, %12 : vector<8x1xf32>
    %cst_8 = arith.constant 9.99999974E-6 : f32
    %14 = vector.broadcast %cst_8 : f32 to vector<8x1xf32>
    %15 = arith.addf %13, %14 : vector<8x1xf32>
    %16 = math.rsqrt %15 : vector<8x1xf32>
    %17 = vector.broadcast %6 : vector<8x1xf32> to vector<8x16xf32>
    %18 = arith.subf %0, %17 : vector<8x16xf32>
    %19 = vector.broadcast %16 : vector<8x1xf32> to vector<8x16xf32>
    %20 = arith.mulf %18, %19 : vector<8x16xf32>
    %21 = vector.broadcast %1 : vector<8x1xf32> to vector<8x16xf32>
    %22 = arith.mulf %20, %21 : vector<8x16xf32>
    %23 = vector.broadcast %2 : vector<8x1xf32> to vector<8x16xf32>
    %24 = arith.addf %22, %23 : vector<8x16xf32>
    %c0_9 = arith.constant 0 : index
    %c0_10 = arith.constant 0 : index
    %25 = vector.load %arg11[%c0_9, %c0_10] : memref<8x16xf32, #tpu.memory_space<vmem>>, vector<8x16xf32>
    tpu.vector_store %arg11[%c0_9, %c0_10], %24 {strides = array<i32>} : memref<8x16xf32, #tpu.memory_space<vmem>>, vector<8x16xf32>,
    %cst_11 = arith.constant 9.99999974E-6 : f32
    %26 = vector.broadcast %cst_11 : f32 to vector<8x1xf32>
    %27 = arith.addf %13, %26 : vector<8x1xf32>
    %28 = arith.mulf %27, %16 : vector<8x1xf32>
    %cst_12 = arith.constant 1.000000e-10 : f32
    %29 = vector.broadcast %cst_12 : f32 to vector<8x1xf32>
    %30 = arith.addf %1, %29 : vector<8x1xf32>
    %31 = arith.divf %28, %30 : vector<8x1xf32>
    %32 = arith.mulf %2, %31 : vector<8x1xf32>
    %33 = arith.subf %6, %32 : vector<8x1xf32>
    %c0_13 = arith.constant 0 : index
    %c0_14 = arith.constant 0 : index
    %34 = vector.load %arg14[%c0_13, %c0_14] : memref<8x1xf32, #tpu.memory_space<vmem>>, vector<8x1xf32>
    tpu.vector_store %arg14[%c0_13, %c0_14], %31 {strides = array<i32>} : memref<8x1xf32, #tpu.memory_space<vmem>>, vector<8x1xf32>,
    %c0_15 = arith.constant 0 : index
    %c0_16 = arith.constant 0 : index
    %35 = vector.load %arg15[%c0_15, %c0_16] : memref<8x1xf32, #tpu.memory_space<vmem>>, vector<8x1xf32>
    tpu.vector_store %arg15[%c0_15, %c0_16], %33 {strides = array<i32>} : memref<8x1xf32, #tpu.memory_space<vmem>>, vector<8x1xf32>,
    %c0_17 = arith.constant 0 : index
    %c0_18 = arith.constant 0 : index
    %36 = vector.load %arg3[%c0_17, %c0_18] : memref<8x1xf32, #tpu.memory_space<vmem>>, vector<8x1xf32>
    %c0_19 = arith.constant 0 : index
    %c0_20 = arith.constant 0 : index
    %37 = vector.load %arg4[%c0_19, %c0_20] : memref<16x34xf32, #tpu.memory_space<vmem>>, vector<16x34xf32>
    %c0_21 = arith.constant 0 : index
    %c0_22 = arith.constant 0 : index
    %38 = vector.load %arg5[%c0_21, %c0_22] : memref<1x8xf32, #tpu.memory_space<vmem>>, vector<1x8xf32>
    %cst_23 = arith.constant dense<0.000000e+00> : vector<8x34xf32>
    %39 = tpu.matmul %24, %37, %cst_23 {dimension_numbers = #tpu.dot_dimension_numbers<[1], [0], [0], [1], [0, 0, 1, 1], [], []>} : vector<8x16xf32>, vector<16x34xf32>, vector<8x34xf32> -> vector<8x34xf32>
    %40 = vector.extract_strided_slice %39 {offsets = [0, 0], sizes = [8, 8], strides = [1, 1]} : vector<8x34xf32> to vector<8x8xf32>
    %41 = vector.broadcast %38 : vector<1x8xf32> to vector<8x8xf32>
    %42 = arith.addf %40, %41 : vector<8x8xf32>
    %43 = vector.extract_strided_slice %39 {offsets = [0, 16], sizes = [8, 18], strides = [1, 1]} : vector<8x34xf32> to vector<8x18xf32>
    %c0_24 = arith.constant 0 : index
    %c0_25 = arith.constant 0 : index
    %44 = vector.load %arg12[%c0_24, %c0_25] : memref<8x18xf32, #tpu.memory_space<vmem>>, vector<8x18xf32>
    tpu.vector_store %arg12[%c0_24, %c0_25], %43 {strides = array<i32>} : memref<8x18xf32, #tpu.memory_space<vmem>>, vector<8x18xf32>,
    %45 = vector.extract_strided_slice %39 {offsets = [0, 8], sizes = [8, 8], strides = [1, 1]} : vector<8x34xf32> to vector<8x8xf32>
    %46 = vector.broadcast %36 : vector<8x1xf32> to vector<8x8xf32>
    %47 = arith.mulf %46, %45 : vector<8x8xf32>
    %c0_26 = arith.constant 0 : index
    %c0_27 = arith.constant 0 : index
    %48 = vector.load %arg6[%c0_26, %c0_27] : memref<8x4xf32, #tpu.memory_space<vmem>>, vector<8x4xf32>
    %c0_28 = arith.constant 0 : index
    %c0_29 = arith.constant 0 : index
    %49 = vector.load %arg7[%c0_28, %c0_29] : memref<1x4xf32, #tpu.memory_space<vmem>>, vector<1x4xf32>
    %cst_30 = arith.constant dense<0.000000e+00> : vector<8x4xf32>
    %50 = tpu.matmul %47, %48, %cst_30 {dimension_numbers = #tpu.dot_dimension_numbers<[1], [0], [0], [1], [0, 0, 1, 1], [], []>} : vector<8x8xf32>, vector<8x4xf32>, vector<8x4xf32> -> vector<8x4xf32>
    %51 = vector.broadcast %49 : vector<1x4xf32> to vector<8x4xf32>
    %52 = arith.addf %50, %51 : vector<8x4xf32>
    %c0_31 = arith.constant 0 : index
    %c0_32 = arith.constant 0 : index
    %53 = vector.load %arg8[%c0_31, %c0_32] : memref<8x8xf32, #tpu.memory_space<vmem>>, vector<8x8xf32>
    %c0_33 = arith.constant 0 : index
    %c0_34 = arith.constant 0 : index
    %54 = vector.load %arg9[%c0_33, %c0_34] : memref<4x8xf32, #tpu.memory_space<vmem>>, vector<4x8xf32>
    %c0_35 = arith.constant 0 : index
    %c0_36 = arith.constant 0 : index
    %55 = vector.load %arg10[%c0_35, %c0_36] : memref<1x8xf32, #tpu.memory_space<vmem>>, vector<1x8xf32>
    %cst_37 = arith.constant dense<0.000000e+00> : vector<8x8xf32>
    %56 = tpu.matmul %42, %53, %cst_37 {dimension_numbers = #tpu.dot_dimension_numbers<[1], [0], [0], [1], [0, 0, 1, 1], [], []>} : vector<8x8xf32>, vector<8x8xf32>, vector<8x8xf32> -> vector<8x8xf32>
    %cst_38 = arith.constant dense<0.000000e+00> : vector<8x8xf32>
    %57 = tpu.matmul %52, %54, %cst_38 {dimension_numbers = #tpu.dot_dimension_numbers<[1], [0], [0], [1], [0, 0, 1, 1], [], []>} : vector<8x4xf32>, vector<4x8xf32>, vector<8x8xf32> -> vector<8x8xf32>
    %58 = arith.addf %56, %57 : vector<8x8xf32>
    %59 = vector.broadcast %55 : vector<1x8xf32> to vector<8x8xf32>
    %60 = arith.addf %58, %59 : vector<8x8xf32>
    %c0_39 = arith.constant 0 : index
    %c0_40 = arith.constant 0 : index
    %61 = vector.load %arg13[%c0_39, %c0_40] : memref<8x8xf32, #tpu.memory_space<vmem>>, vector<8x8xf32>
    tpu.vector_store %arg13[%c0_39, %c0_40], %60 {strides = array<i32>} : memref<8x8xf32, #tpu.memory_space<vmem>>, vector<8x8xf32>,
    return
  }
}

module attributes {stable_mosaic.version = 11 : i64} {
  func.func @head_kernel(%arg0: memref<8x16xf32, #tpu.memory_space<vmem>>, %arg1: memref<8x18xf32, #tpu.memory_space<vmem>>, %arg2: memref<1x18xf32, #tpu.memory_space<vmem>>, %arg3: memref<8x8xf32, #tpu.memory_space<vmem>>, %arg4: memref<8x1xf32, #tpu.memory_space<vmem>>, %arg5: memref<8x1xf32, #tpu.memory_space<vmem>>, %arg6: memref<18x16xf32, #tpu.memory_space<vmem>>, %arg7: memref<16x264xf32, #tpu.memory_space<vmem>>, %arg8: memref<1x128xf32, #tpu.memory_space<vmem>>, %arg9: memref<1x128xf32, #tpu.memory_space<vmem>>, %arg10: memref<1x8xf32, #tpu.memory_space<vmem>>, %arg11: memref<128x8xf32, #tpu.memory_space<vmem>>, %arg12: memref<1x8xf32, #tpu.memory_space<vmem>>, %arg13: memref<1x8xf32, #tpu.memory_space<vmem>>, %arg14: memref<1x8xf32, #tpu.memory_space<vmem>>, %arg15: memref<8x8xf32, #tpu.memory_space<vmem>>) attributes {dimension_semantics = [], scalar_prefetch = 0 : i64, scratch_operands = 0 : i64, tpu.core_type = #tpu.core_type<tc>} {
    %c0 = arith.constant 0 : index
    %c0_0 = arith.constant 0 : index
    %0 = vector.load %arg1[%c0, %c0_0] : memref<8x18xf32, #tpu.memory_space<vmem>>, vector<8x18xf32>
    %c0_1 = arith.constant 0 : index
    %c0_2 = arith.constant 0 : index
    %1 = vector.load %arg2[%c0_1, %c0_2] : memref<1x18xf32, #tpu.memory_space<vmem>>, vector<1x18xf32>
    %2 = vector.broadcast %1 : vector<1x18xf32> to vector<8x18xf32>
    %3 = arith.mulf %0, %2 : vector<8x18xf32>
    %c0_3 = arith.constant 0 : index
    %c0_4 = arith.constant 0 : index
    %4 = vector.load %arg6[%c0_3, %c0_4] : memref<18x16xf32, #tpu.memory_space<vmem>>, vector<18x16xf32>
    %cst = arith.constant dense<0.000000e+00> : vector<8x16xf32>
    %5 = tpu.matmul %3, %4, %cst {dimension_numbers = #tpu.dot_dimension_numbers<[1], [0], [0], [1], [0, 0, 1, 1], [], []>} : vector<8x18xf32>, vector<18x16xf32>, vector<8x16xf32> -> vector<8x16xf32>
    %c0_5 = arith.constant 0 : index
    %c0_6 = arith.constant 0 : index
    %6 = vector.load %arg0[%c0_5, %c0_6] : memref<8x16xf32, #tpu.memory_space<vmem>>, vector<8x16xf32>
    %7 = arith.mulf %6, %5 : vector<8x16xf32>
    %c0_7 = arith.constant 0 : index
    %c0_8 = arith.constant 0 : index
    %8 = vector.load %arg7[%c0_7, %c0_8] : memref<16x264xf32, #tpu.memory_space<vmem>>, vector<16x264xf32>
    %cst_9 = arith.constant dense<0.000000e+00> : vector<8x264xf32>
    %9 = tpu.matmul %7, %8, %cst_9 {dimension_numbers = #tpu.dot_dimension_numbers<[1], [0], [0], [1], [0, 0, 1, 1], [], []>} : vector<8x16xf32>, vector<16x264xf32>, vector<8x264xf32> -> vector<8x264xf32>
    %10 = vector.extract_strided_slice %9 {offsets = [0, 0], sizes = [8, 128], strides = [1, 1]} : vector<8x264xf32> to vector<8x128xf32>
    %c0_10 = arith.constant 0 : index
    %c0_11 = arith.constant 0 : index
    %11 = vector.load %arg8[%c0_10, %c0_11] : memref<1x128xf32, #tpu.memory_space<vmem>>, vector<1x128xf32>
    %12 = vector.broadcast %11 : vector<1x128xf32> to vector<8x128xf32>
    %13 = arith.addf %10, %12 : vector<8x128xf32>
    %cst_12 = arith.constant 5.000000e-01 : f32
    %14 = vector.broadcast %cst_12 : f32 to vector<8x128xf32>
    %15 = arith.mulf %14, %13 : vector<8x128xf32>
    %cst_13 = arith.constant 4.471500e-02 : f32
    %16 = vector.broadcast %cst_13 : f32 to vector<8x128xf32>
    %17 = arith.mulf %16, %13 : vector<8x128xf32>
    %18 = arith.mulf %17, %13 : vector<8x128xf32>
    %19 = arith.mulf %18, %13 : vector<8x128xf32>
    %20 = arith.addf %13, %19 : vector<8x128xf32>
    %cst_14 = arith.constant 0.797884583 : f32
    %21 = vector.broadcast %cst_14 : f32 to vector<8x128xf32>
    %22 = arith.mulf %21, %20 : vector<8x128xf32>
    %23 = math.tanh %22 : vector<8x128xf32>
    %cst_15 = arith.constant 1.000000e+00 : f32
    %24 = vector.broadcast %cst_15 : f32 to vector<8x128xf32>
    %25 = arith.addf %24, %23 : vector<8x128xf32>
    %26 = arith.mulf %15, %25 : vector<8x128xf32>
    %27 = vector.extract_strided_slice %9 {offsets = [0, 128], sizes = [8, 128], strides = [1, 1]} : vector<8x264xf32> to vector<8x128xf32>
    %c0_16 = arith.constant 0 : index
    %c0_17 = arith.constant 0 : index
    %28 = vector.load %arg9[%c0_16, %c0_17] : memref<1x128xf32, #tpu.memory_space<vmem>>, vector<1x128xf32>
    %29 = vector.broadcast %28 : vector<1x128xf32> to vector<8x128xf32>
    %30 = arith.addf %27, %29 : vector<8x128xf32>
    %31 = vector.extract_strided_slice %9 {offsets = [0, 256], sizes = [8, 8], strides = [1, 1]} : vector<8x264xf32> to vector<8x8xf32>
    %c0_18 = arith.constant 0 : index
    %c0_19 = arith.constant 0 : index
    %32 = vector.load %arg10[%c0_18, %c0_19] : memref<1x8xf32, #tpu.memory_space<vmem>>, vector<1x8xf32>
    %33 = vector.broadcast %32 : vector<1x8xf32> to vector<8x8xf32>
    %34 = arith.addf %31, %33 : vector<8x8xf32>
    %35 = arith.mulf %26, %30 : vector<8x128xf32>
    %c0_20 = arith.constant 0 : index
    %c0_21 = arith.constant 0 : index
    %36 = vector.load %arg11[%c0_20, %c0_21] : memref<128x8xf32, #tpu.memory_space<vmem>>, vector<128x8xf32>
    %cst_22 = arith.constant dense<0.000000e+00> : vector<8x8xf32>
    %37 = tpu.matmul %35, %36, %cst_22 {dimension_numbers = #tpu.dot_dimension_numbers<[1], [0], [0], [1], [0, 0, 1, 1], [], []>} : vector<8x128xf32>, vector<128x8xf32>, vector<8x8xf32> -> vector<8x8xf32>
    %c0_23 = arith.constant 0 : index
    %c0_24 = arith.constant 0 : index
    %38 = vector.load %arg12[%c0_23, %c0_24] : memref<1x8xf32, #tpu.memory_space<vmem>>, vector<1x8xf32>
    %39 = vector.broadcast %38 : vector<1x8xf32> to vector<8x8xf32>
    %40 = arith.addf %37, %39 : vector<8x8xf32>
    %cst_25 = arith.constant 5.000000e-01 : f32
    %41 = vector.broadcast %cst_25 : f32 to vector<8x8xf32>
    %42 = arith.mulf %41, %40 : vector<8x8xf32>
    %cst_26 = arith.constant 4.471500e-02 : f32
    %43 = vector.broadcast %cst_26 : f32 to vector<8x8xf32>
    %44 = arith.mulf %43, %40 : vector<8x8xf32>
    %45 = arith.mulf %44, %40 : vector<8x8xf32>
    %46 = arith.mulf %45, %40 : vector<8x8xf32>
    %47 = arith.addf %40, %46 : vector<8x8xf32>
    %cst_27 = arith.constant 0.797884583 : f32
    %48 = vector.broadcast %cst_27 : f32 to vector<8x8xf32>
    %49 = arith.mulf %48, %47 : vector<8x8xf32>
    %50 = math.tanh %49 : vector<8x8xf32>
    %cst_28 = arith.constant 1.000000e+00 : f32
    %51 = vector.broadcast %cst_28 : f32 to vector<8x8xf32>
    %52 = arith.addf %51, %50 : vector<8x8xf32>
    %53 = arith.mulf %42, %52 : vector<8x8xf32>
    %cst_29 = arith.constant dense<0.000000e+00> : vector<8xf32>
    %54 = vector.multi_reduction <add>, %53, %cst_29 [1] : vector<8x8xf32> to vector<8xf32>
    %55 = vector.shape_cast %54 : vector<8xf32> to vector<8x1xf32>
    %cst_30 = arith.constant 8.000000e+00 : f32
    %56 = vector.broadcast %cst_30 : f32 to vector<8x1xf32>
    %57 = arith.divf %55, %56 : vector<8x1xf32>
    %58 = vector.broadcast %57 : vector<8x1xf32> to vector<8x8xf32>
    %59 = arith.subf %53, %58 : vector<8x8xf32>
    %60 = arith.mulf %59, %59 : vector<8x8xf32>
    %cst_31 = arith.constant dense<0.000000e+00> : vector<8xf32>
    %61 = vector.multi_reduction <add>, %60, %cst_31 [1] : vector<8x8xf32> to vector<8xf32>
    %62 = vector.shape_cast %61 : vector<8xf32> to vector<8x1xf32>
    %cst_32 = arith.constant 8.000000e+00 : f32
    %63 = vector.broadcast %cst_32 : f32 to vector<8x1xf32>
    %64 = arith.divf %62, %63 : vector<8x1xf32>
    %65 = vector.broadcast %57 : vector<8x1xf32> to vector<8x8xf32>
    %66 = arith.subf %53, %65 : vector<8x8xf32>
    %cst_33 = arith.constant 9.99999974E-6 : f32
    %67 = vector.broadcast %cst_33 : f32 to vector<8x1xf32>
    %68 = arith.addf %64, %67 : vector<8x1xf32>
    %69 = math.rsqrt %68 : vector<8x1xf32>
    %70 = vector.broadcast %69 : vector<8x1xf32> to vector<8x8xf32>
    %71 = arith.mulf %66, %70 : vector<8x8xf32>
    %c0_34 = arith.constant 0 : index
    %c0_35 = arith.constant 0 : index
    %72 = vector.load %arg13[%c0_34, %c0_35] : memref<1x8xf32, #tpu.memory_space<vmem>>, vector<1x8xf32>
    %73 = vector.broadcast %72 : vector<1x8xf32> to vector<8x8xf32>
    %74 = arith.mulf %71, %73 : vector<8x8xf32>
    %c0_36 = arith.constant 0 : index
    %c0_37 = arith.constant 0 : index
    %75 = vector.load %arg14[%c0_36, %c0_37] : memref<1x8xf32, #tpu.memory_space<vmem>>, vector<1x8xf32>
    %76 = vector.broadcast %75 : vector<1x8xf32> to vector<8x8xf32>
    %77 = arith.addf %74, %76 : vector<8x8xf32>
    %78 = arith.addf %34, %77 : vector<8x8xf32>
    %c0_38 = arith.constant 0 : index
    %c0_39 = arith.constant 0 : index
    %79 = vector.load %arg3[%c0_38, %c0_39] : memref<8x8xf32, #tpu.memory_space<vmem>>, vector<8x8xf32>
    %80 = arith.mulf %79, %78 : vector<8x8xf32>
    %c0_40 = arith.constant 0 : index
    %c0_41 = arith.constant 0 : index
    %81 = vector.load %arg4[%c0_40, %c0_41] : memref<8x1xf32, #tpu.memory_space<vmem>>, vector<8x1xf32>
    %82 = vector.broadcast %81 : vector<8x1xf32> to vector<8x8xf32>
    %83 = arith.mulf %80, %82 : vector<8x8xf32>
    %c0_42 = arith.constant 0 : index
    %c0_43 = arith.constant 0 : index
    %84 = vector.load %arg5[%c0_42, %c0_43] : memref<8x1xf32, #tpu.memory_space<vmem>>, vector<8x1xf32>
    %85 = vector.broadcast %84 : vector<8x1xf32> to vector<8x8xf32>
    %86 = arith.addf %83, %85 : vector<8x8xf32>
    %c0_44 = arith.constant 0 : index
    %c0_45 = arith.constant 0 : index
    %87 = vector.load %arg15[%c0_44, %c0_45] : memref<8x8xf32, #tpu.memory_space<vmem>>, vector<8x8xf32>
    tpu.vector_store %arg15[%c0_44, %c0_45], %86 {strides = array<i32>} : memref<8x8xf32, #tpu.memory_space<vmem>>, vector<8x8xf32>,
    return
  }
}

</mosaic_0001>

<llo_original>
// kernel: model_forward.2
$region0: #{model_forward.2}
  #allocation0 [shape = 'u32[]', space=smem, size = 0x4, offset = 0x4, fixed_abs, tag = 'smem constant byte address 0x4 - core index']
  #allocation1 [shape = 'u32[144,128]{1,0:T(1,128)}', space=vmem, size = 0x12000, scoped, tag = 'internal scratch']
  %s0 = inlined_call_operand.vmem [shape: f32[8,16], index: 0, kind: input, shape index: {}]
  %s1 = inlined_call_operand.vmem [shape: f32[8,1], index: 1, kind: input, shape index: {}]
  %s2 = inlined_call_operand.vmem [shape: f32[8,1], index: 2, kind: input, shape index: {}]
  %s3 = inlined_call_operand.vmem [shape: f32[8,1], index: 3, kind: input, shape index: {}]
  %s4 = inlined_call_operand.vmem [shape: f32[16,34], index: 4, kind: input, shape index: {}]
  %s5 = inlined_call_operand.vmem [shape: f32[1,8], index: 5, kind: input, shape index: {}]
  %s6 = inlined_call_operand.vmem [shape: f32[8,4], index: 6, kind: input, shape index: {}]
  %s7 = inlined_call_operand.vmem [shape: f32[1,4], index: 7, kind: input, shape index: {}]
  %s8 = inlined_call_operand.vmem [shape: f32[8,8], index: 8, kind: input, shape index: {}]
  %s9 = inlined_call_operand.vmem [shape: f32[4,8], index: 9, kind: input, shape index: {}]
  %s10 = inlined_call_operand.vmem [shape: f32[1,8], index: 10, kind: input, shape index: {}]
  %s11 = inlined_call_operand.vmem [shape: f32[8,16], index: 11, kind: output, shape index: {0}]
  %s12 = inlined_call_operand.vmem [shape: f32[8,18], index: 12, kind: output, shape index: {1}]
  %s13 = inlined_call_operand.vmem [shape: f32[8,8], index: 13, kind: output, shape index: {2}]
  %s14 = inlined_call_operand.vmem [shape: f32[8,1], index: 14, kind: output, shape index: {3}]
  %s15 = inlined_call_operand.vmem [shape: f32[8,1], index: 15, kind: output, shape index: {4}]
  %16 = xla_tuple %s11, %s12, %s13, %s14, %s15
  %s17 = sld [smem:[#allocation0]]
  $region86: #{model_forward.2} parent=0
    _
  %s19 = ssub.s32 1, %s17
  %s20 = scalar_select 0, %s19, %s17
  // Predicated region
  $region2: #{model_forward.2} parent=0 // pred_check
    _
  $region3: #{model_forward.2} parent=0 // pred_check_branch
    %22 = sbr.rel (0) target = $region5
  $region4: #{model_forward.2} parent=0 // pred_region
    _
  $region5: #{model_forward.2} parent=0 // pred_fallthru
    _
  // Predicated region
  $region6: #{model_forward.2} parent=0 // pred_check
    _
  $region7: #{model_forward.2} parent=0 // pred_check_branch
    %24 = sbr.rel (0) target = $region9
  $region8: #{model_forward.2} parent=0 // pred_region
    _
  $region9: #{model_forward.2} parent=0 // pred_fallthru
    _
  // Predicated region
  $region10: #{model_forward.2} parent=0 // pred_check
    _
  $region11: #{model_forward.2} parent=0 // pred_check_branch
    %26 = sbr.rel (0) target = $region13
  $region12: #{model_forward.2} parent=0 // pred_region
    _
  $region13: #{model_forward.2} parent=0 // pred_fallthru
    _
  // Predicated region
  $region14: #{model_forward.2} parent=0 // pred_check
    _
  $region15: #{model_forward.2} parent=0 // pred_check_branch
    %28 = sbr.rel (0) target = $region17
  $region16: #{model_forward.2} parent=0 // pred_region
    _
  $region17: #{model_forward.2} parent=0 // pred_fallthru
    _
  // Predicated region
  $region18: #{model_forward.2} parent=0 // pred_check
    _
  $region19: #{model_forward.2} parent=0 // pred_check_branch
    %30 = sbr.rel (0) target = $region21
  $region20: #{model_forward.2} parent=0 // pred_region
    _
  $region21: #{model_forward.2} parent=0 // pred_fallthru
    _
  // Predicated region
  $region22: #{model_forward.2} parent=0 // pred_check
    _
  $region23: #{model_forward.2} parent=0 // pred_check_branch
    %32 = sbr.rel (0) target = $region25
  $region24: #{model_forward.2} parent=0 // pred_region
    _
  $region25: #{model_forward.2} parent=0 // pred_fallthru
    _
  // Predicated region
  $region26: #{model_forward.2} parent=0 // pred_check
    _
  $region27: #{model_forward.2} parent=0 // pred_check_branch
    %34 = sbr.rel (0) target = $region29
  $region28: #{model_forward.2} parent=0 // pred_region
    _
  $region29: #{model_forward.2} parent=0 // pred_fallthru
    _
  // Predicated region
  $region30: #{model_forward.2} parent=0 // pred_check
    _
  $region31: #{model_forward.2} parent=0 // pred_check_branch
    %36 = sbr.rel (0) target = $region33
  $region32: #{model_forward.2} parent=0 // pred_region
    _
  $region33: #{model_forward.2} parent=0 // pred_fallthru
    _
  // Predicated region
  $region34: #{model_forward.2} parent=0 // pred_check
    _
  $region35: #{model_forward.2} parent=0 // pred_check_branch
    %38 = sbr.rel (0) target = $region37
  $region36: #{model_forward.2} parent=0 // pred_region
    _
  $region37: #{model_forward.2} parent=0 // pred_fallthru
    _
  // Predicated region
  $region38: #{model_forward.2} parent=0 // pred_check
    _
  $region39: #{model_forward.2} parent=0 // pred_check_branch
    %40 = sbr.rel (0) target = $region41
  $region40: #{model_forward.2} parent=0 // pred_region
    _
  $region41: #{model_forward.2} parent=0 // pred_fallthru
    _
  // Predicated region
  $region42: #{model_forward.2} parent=0 // pred_check
    _
  $region43: #{model_forward.2} parent=0 // pred_check_branch
    %42 = sbr.rel (0) target = $region45
  $region44: #{model_forward.2} parent=0 // pred_region
    _
  $region45: #{model_forward.2} parent=0 // pred_fallthru
    _
  %v43 = vld [vmem:[%s0] sm:$0xff]
  %v44 = vld [vmem:[%s1] sm:$0xff]
  %v45 = vld [vmem:[%s2] sm:$0xff]
  %vm46 = vcmask 130048
  %v47 = vsel %vm46, %v43, 0.0
  %48 = vadd.xlane.f32.xlu0 %v47
  %v49 = vpop.xlane.xlu0 %48
  %v50 = vrcp.pop 16.0
  %v51 = vmul.f32 %v49, %v50
  %v52 = vsub.f32 %v43, %v51
  %v53 = vmul.f32 %v52, %v52
  %v54 = vsel %vm46, %v53, 0.0
  %55 = vadd.xlane.f32.xlu0 %v54
  %v56 = vpop.xlane.xlu0 %55
  %v57 = vmul.f32 %v56, %v50
  %v58 = vadd.f32 %v57, 1e-05
  %v59 = vrsqrt.pop %v58
  %v60 = vmul.f32 %v52, %v59
  %62 = vset.pattern.permute.xlu0 0
  %63 = vperm.xlu0 %62, %v44
  %v64 = vpop.permute.xlu0 %63
  %v66 = vmul.f32 %v60, %v64
  %68 = vset.pattern.permute.xlu0 0
  %69 = vperm.xlu0 %68, %v45
  %v70 = vpop.permute.xlu0 %69
  %v72 = vadd.f32 %v66, %v70
  %73 = vst.msk [vmem:[%s11] sm:$0xff] %vm46, %v72
  %v74 = vmul.f32 %v58, %v59
  %v75 = vadd.f32 %v44, 1e-10
  %v76 = vrcp.pop %v75
  %v77 = vmul.f32 %v74, %v76
  %v78 = vmul.f32 %v45, %v77
  %v79 = vsub.f32 %v51, %v78
  %vm80 = vcmask 7168
  %81 = vst.msk [vmem:[%s14] sm:$0xff] %vm80, %v77
  %82 = vst.msk [vmem:[%s15] sm:$0xff] %vm80, %v79
  %v83 = vld [vmem:[%s3] sm:$0xff]
  %v84 = vld [vmem:[%s4] sm:$0xff]
  %v85 = vld [vmem:[%s4 + $0x8] sm:$0xff]
  %v86 = vld [vmem:[%s5] sm:$0x1]
  %v88 = vsel %vm46, %v72, 0
  %90 = vmatprep.subr.mxu0 0.0
  %91 = vmatpush1.msra.mxu0 0.0
  %92 = vmatprep.subr.mxu0 0.0
  %93 = vmatpush1.msra.mxu0 0.0
  %94 = vmatprep.subr.mxu0 0.0
  %95 = vmatpush1.msra.mxu0 0.0
  %96 = vmatprep.subr.mxu0 0.0
  %97 = vmatpush1.msra.mxu0 0.0
  %98 = vmatprep.subr.mxu0 0.0
  %99 = vmatpush1.msra.mxu0 0.0
  %100 = vmatprep.subr.mxu0 0.0
  %101 = vmatpush1.msra.mxu0 0.0
  %102 = vmatprep.subr.mxu0 0.0
  %103 = vmatpush1.msra.mxu0 0.0
  %104 = vmatprep.subr.mxu0 0.0
  %105 = vmatpush1.msra.mxu0 0.0
  %106 = vmatprep.subr.mxu0 0.0
  %107 = vmatpush1.msra.mxu0 0.0
  %108 = vmatprep.subr.mxu0 0.0
  %109 = vmatpush1.msra.mxu0 0.0
  %110 = vmatprep.subr.mxu0 0.0
  %111 = vmatpush1.msra.mxu0 0.0
  %112 = vmatprep.subr.mxu0 0.0
  %113 = vmatpush1.msra.mxu0 0.0
  %114 = vmatprep.subr.mxu0 0.0
  %115 = vmatpush1.msra.mxu0 0.0
  %116 = vmatprep.subr.mxu0 0.0
  %117 = vmatpush1.msra.mxu0 0.0
  %118 = vmatprep.subr.mxu0 0.0
  %119 = vmatpush1.msra.mxu0 %v85
  %120 = vmatprep.subr.mxu0 0.0
  %121 = vmatpush1.msra.mxu0 %v84
  %122 = vmatprep.subr.mxu0 0.0
  %123 = vmatpush2.msra.mxu0 0.0
  %124 = vmatprep.subr.mxu0 0.0
  %125 = vmatpush2.msra.mxu0 0.0
  %126 = vmatprep.subr.mxu0 0.0
  %127 = vmatpush2.msra.mxu0 0.0
  %128 = vmatprep.subr.mxu0 0.0
  %129 = vmatpush2.msra.mxu0 0.0
  %130 = vmatprep.subr.mxu0 0.0
  %131 = vmatpush2.msra.mxu0 0.0
  %132 = vmatprep.subr.mxu0 0.0
  %133 = vmatpush2.msra.mxu0 0.0
  %134 = vmatprep.subr.mxu0 0.0
  %135 = vmatpush2.msra.mxu0 0.0
  %136 = vmatprep.subr.mxu0 0.0
  %137 = vmatpush2.msra.mxu0 0.0
  %138 = vmatprep.subr.mxu0 0.0
  %139 = vmatpush2.msra.mxu0 0.0
  %140 = vmatprep.subr.mxu0 0.0
  %141 = vmatpush2.msra.mxu0 0.0
  %142 = vmatprep.subr.mxu0 0.0
  %143 = vmatpush2.msra.mxu0 0.0
  %144 = vmatprep.subr.mxu0 0.0
  %145 = vmatpush2.msra.mxu0 0.0
  %146 = vmatprep.subr.mxu0 0.0
  %147 = vmatpush2.msra.mxu0 0.0
  %148 = vmatprep.subr.mxu0 0.0
  %149 = vmatpush2.msra.mxu0 0.0
  %150 = vmatprep.subr.mxu0 0.0
  %151 = vmatpush2.msra.mxu0 0.0
  %152 = vmatprep.subr.mxu0 0.0
  %153 = vmatpush2.msra.mxu0 0.0
  %154 = vmatprep.mubr.f32.mxu0 0.0
  %155 = vmatmul.mubr.f32.gmra.mxu0 %v88
  %v156 = vpop.f32.mrf.mxu0
  %v157 = vadd.f32 0.0, %v156
  %v158 = vpop.f32.mrf.mxu0
  %159 = vdwg.mxu0
  %v161 = vlaneseq
  %v162 = vshrl.u32 %v161, 7
  %v163 = vsub.s32 0, %v162
  %v164 = vrot.slane %v86, %v163
  %v166 = vadd.f32 %v157, %v164
  %168 = vrot.lane.b32.xlu0 %v157, 112
  %v169 = vpop.permute.xlu0 %168
  %vm171 = vcmask 146432
  %172 = vst.msk [vmem:[%s12] sm:$0xff] %vm171, %v169
  %174 = vset.pattern.permute.xlu0 0
  %175 = vperm.xlu0 %174, %v83
  %v176 = vpop.permute.xlu0 %175
  %v178 = vmul.f32 %v176, %v157
  %v179 = vld [vmem:[%s6] sm:$0xff]
  %v180 = vld [vmem:[%s7] sm:$0x1]
  %v182 = vlaneseq
  %v183 = vshrl.u32 %v182, 7
  %v184 = vsub.s32 0, %v183
  %v185 = vrot.slane %v180, %v184
  %188 = vrot.lane.b32.xlu0 %v178, 120
  %v189 = vpop.permute.xlu0 %188
  %vm190 = vcmask 64512
  %v191 = vsel %vm190, %v189, 0
  %193 = vmatprep.subr.mxu0 0.0
  %194 = vmatpush1.msra.mxu0 0.0
  %195 = vmatprep.subr.mxu0 0.0
  %196 = vmatpush1.msra.mxu0 0.0
  %197 = vmatprep.subr.mxu0 0.0
  %198 = vmatpush1.msra.mxu0 0.0
  %199 = vmatprep.subr.mxu0 0.0
  %200 = vmatpush1.msra.mxu0 0.0
  %201 = vmatprep.subr.mxu0 0.0
  %202 = vmatpush1.msra.mxu0 0.0
  %203 = vmatprep.subr.mxu0 0.0
  %204 = vmatpush1.msra.mxu0 0.0
  %205 = vmatprep.subr.mxu0 0.0
  %206 = vmatpush1.msra.mxu0 0.0
  %207 = vmatprep.subr.mxu0 0.0
  %208 = vmatpush1.msra.mxu0 0.0
  %209 = vmatprep.subr.mxu0 0.0
  %210 = vmatpush1.msra.mxu0 0.0
  %211 = vmatprep.subr.mxu0 0.0
  %212 = vmatpush1.msra.mxu0 0.0
  %213 = vmatprep.subr.mxu0 0.0
  %214 = vmatpush1.msra.mxu0 0.0
  %215 = vmatprep.subr.mxu0 0.0
  %216 = vmatpush1.msra.mxu0 0.0
  %217 = vmatprep.subr.mxu0 0.0
  %218 = vmatpush1.msra.mxu0 0.0
  %219 = vmatprep.subr.mxu0 0.0
  %220 = vmatpush1.msra.mxu0 0.0
  %221 = vmatprep.subr.mxu0 0.0
  %222 = vmatpush1.msra.mxu0 0.0
  %223 = vmatprep.subr.mxu0 0.0
  %224 = vmatpush1.msra.mxu0 %v179
  %225 = vmatprep.subr.mxu0 0.0
  %226 = vmatpush2.msra.mxu0 0.0
  %227 = vmatprep.subr.mxu0 0.0
  %228 = vmatpush2.msra.mxu0 0.0
  %229 = vmatprep.subr.mxu0 0.0
  %230 = vmatpush2.msra.mxu0 0.0
  %231 = vmatprep.subr.mxu0 0.0
  %232 = vmatpush2.msra.mxu0 0.0
  %233 = vmatprep.subr.mxu0 0.0
  %234 = vmatpush2.msra.mxu0 0.0
  %235 = vmatprep.subr.mxu0 0.0
  %236 = vmatpush2.msra.mxu0 0.0
  %237 = vmatprep.subr.mxu0 0.0
  %238 = vmatpush2.msra.mxu0 0.0
  %239 = vmatprep.subr.mxu0 0.0
  %240 = vmatpush2.msra.mxu0 0.0
  %241 = vmatprep.subr.mxu0 0.0
  %242 = vmatpush2.msra.mxu0 0.0
  %243 = vmatprep.subr.mxu0 0.0
  %244 = vmatpush2.msra.mxu0 0.0
  %245 = vmatprep.subr.mxu0 0.0
  %246 = vmatpush2.msra.mxu0 0.0
  %247 = vmatprep.subr.mxu0 0.0
  %248 = vmatpush2.msra.mxu0 0.0
  %249 = vmatprep.subr.mxu0 0.0
  %250 = vmatpush2.msra.mxu0 0.0
  %251 = vmatprep.subr.mxu0 0.0
  %252 = vmatpush2.msra.mxu0 0.0
  %253 = vmatprep.subr.mxu0 0.0
  %254 = vmatpush2.msra.mxu0 0.0
  %255 = vmatprep.subr.mxu0 0.0
  %256 = vmatpush2.msra.mxu0 0.0
  %257 = vmatprep.mubr.f32.mxu0 0.0
  %258 = vmatmul.mubr.f32.gmra.mxu0 %v191
  %v259 = vpop.f32.mrf.mxu0
  %v260 = vadd.f32 %v185, %v259
  %v261 = vpop.f32.mrf.mxu0
  %262 = vdwg.mxu0
  %v263 = vld [vmem:[%s8] sm:$0xff]
  %v264 = vld [vmem:[%s9] sm:$0xf]
  %v265 = vld [vmem:[%s10] sm:$0x1]
  %vm266 = vcmask 31744
  %v268 = vsel %vm266, %v260, 0
  %vm270 = vcmask 1043456
  %v272 = vsel %vm270, %v264, 0
  %274 = vmatprep.subr.mxu0 0.0
  %275 = vmatpush1.msra.mxu0 0.0
  %276 = vmatprep.subr.mxu0 0.0
  %277 = vmatpush1.msra.mxu0 0.0
  %278 = vmatprep.subr.mxu0 0.0
  %279 = vmatpush1.msra.mxu0 0.0
  %280 = vmatprep.subr.mxu0 0.0
  %281 = vmatpush1.msra.mxu0 0.0
  %282 = vmatprep.subr.mxu0 0.0
  %283 = vmatpush1.msra.mxu0 0.0
  %284 = vmatprep.subr.mxu0 0.0
  %285 = vmatpush1.msra.mxu0 0.0
  %286 = vmatprep.subr.mxu0 0.0
  %287 = vmatpush1.msra.mxu0 0.0
  %288 = vmatprep.subr.mxu0 0.0
  %289 = vmatpush1.msra.mxu0 0.0
  %290 = vmatprep.subr.mxu0 0.0
  %291 = vmatpush1.msra.mxu0 0.0
  %292 = vmatprep.subr.mxu0 0.0
  %293 = vmatpush1.msra.mxu0 0.0
  %294 = vmatprep.subr.mxu0 0.0
  %295 = vmatpush1.msra.mxu0 0.0
  %296 = vmatprep.subr.mxu0 0.0
  %297 = vmatpush1.msra.mxu0 0.0
  %298 = vmatprep.subr.mxu0 0.0
  %299 = vmatpush1.msra.mxu0 0.0
  %300 = vmatprep.subr.mxu0 0.0
  %301 = vmatpush1.msra.mxu0 0.0
  %302 = vmatprep.subr.mxu0 0.0
  %303 = vmatpush1.msra.mxu0 0.0
  %304 = vmatprep.subr.mxu0 0.0
  %305 = vmatpush1.msra.mxu0 %v272
  %306 = vmatprep.subr.mxu0 0.0
  %307 = vmatpush2.msra.mxu0 0.0
  %308 = vmatprep.subr.mxu0 0.0
  %309 = vmatpush2.msra.mxu0 0.0
  %310 = vmatprep.subr.mxu0 0.0
  %311 = vmatpush2.msra.mxu0 0.0
  %312 = vmatprep.subr.mxu0 0.0
  %313 = vmatpush2.msra.mxu0 0.0
  %314 = vmatprep.subr.mxu0 0.0
  %315 = vmatpush2.msra.mxu0 0.0
  %316 = vmatprep.subr.mxu0 0.0
  %317 = vmatpush2.msra.mxu0 0.0
  %318 = vmatprep.subr.mxu0 0.0
  %319 = vmatpush2.msra.mxu0 0.0
  %320 = vmatprep.subr.mxu0 0.0
  %321 = vmatpush2.msra.mxu0 0.0
  %322 = vmatprep.subr.mxu0 0.0
  %323 = vmatpush2.msra.mxu0 0.0
  %324 = vmatprep.subr.mxu0 0.0
  %325 = vmatpush2.msra.mxu0 0.0
  %326 = vmatprep.subr.mxu0 0.0
  %327 = vmatpush2.msra.mxu0 0.0
  %328 = vmatprep.subr.mxu0 0.0
  %329 = vmatpush2.msra.mxu0 0.0
  %330 = vmatprep.subr.mxu0 0.0
  %331 = vmatpush2.msra.mxu0 0.0
  %332 = vmatprep.subr.mxu0 0.0
  %333 = vmatpush2.msra.mxu0 0.0
  %334 = vmatprep.subr.mxu0 0.0
  %335 = vmatpush2.msra.mxu0 0.0
  %336 = vmatprep.subr.mxu0 0.0
  %337 = vmatpush2.msra.mxu0 0.0
  %338 = vmatprep.mubr.f32.mxu0 0.0
  %339 = vmatmul.mubr.f32.gmra.mxu0 %v268
  %v340 = vpop.f32.mrf.mxu0
  %v341 = vadd.f32 0.0, %v340
  %v342 = vpop.f32.mrf.mxu0
  %343 = vdwg.mxu0
  %v345 = vsel %vm190, %v166, 0
  %347 = vmatprep.subr.mxu0 0.0
  %348 = vmatpush1.msra.mxu0 0.0
  %349 = vmatprep.subr.mxu0 0.0
  %350 = vmatpush1.msra.mxu0 0.0
  %351 = vmatprep.subr.mxu0 0.0
  %352 = vmatpush1.msra.mxu0 0.0
  %353 = vmatprep.subr.mxu0 0.0
  %354 = vmatpush1.msra.mxu0 0.0
  %355 = vmatprep.subr.mxu0 0.0
  %356 = vmatpush1.msra.mxu0 0.0
  %357 = vmatprep.subr.mxu0 0.0
  %358 = vmatpush1.msra.mxu0 0.0
  %359 = vmatprep.subr.mxu0 0.0
  %360 = vmatpush1.msra.mxu0 0.0
  %361 = vmatprep.subr.mxu0 0.0
  %362 = vmatpush1.msra.mxu0 0.0
  %363 = vmatprep.subr.mxu0 0.0
  %364 = vmatpush1.msra.mxu0 0.0
  %365 = vmatprep.subr.mxu0 0.0
  %366 = vmatpush1.msra.mxu0 0.0
  %367 = vmatprep.subr.mxu0 0.0
  %368 = vmatpush1.msra.mxu0 0.0
  %369 = vmatprep.subr.mxu0 0.0
  %370 = vmatpush1.msra.mxu0 0.0
  %371 = vmatprep.subr.mxu0 0.0
  %372 = vmatpush1.msra.mxu0 0.0
  %373 = vmatprep.subr.mxu0 0.0
  %374 = vmatpush1.msra.mxu0 0.0
  %375 = vmatprep.subr.mxu0 0.0
  %376 = vmatpush1.msra.mxu0 0.0
  %377 = vmatprep.subr.mxu0 0.0
  %378 = vmatpush1.msra.mxu0 %v263
  %379 = vmatprep.subr.mxu0 0.0
  %380 = vmatpush2.msra.mxu0 0.0
  %381 = vmatprep.subr.mxu0 0.0
  %382 = vmatpush2.msra.mxu0 0.0
  %383 = vmatprep.subr.mxu0 0.0
  %384 = vmatpush2.msra.mxu0 0.0
  %385 = vmatprep.subr.mxu0 0.0
  %386 = vmatpush2.msra.mxu0 0.0
  %387 = vmatprep.subr.mxu0 0.0
  %388 = vmatpush2.msra.mxu0 0.0
  %389 = vmatprep.subr.mxu0 0.0
  %390 = vmatpush2.msra.mxu0 0.0
  %391 = vmatprep.subr.mxu0 0.0
  %392 = vmatpush2.msra.mxu0 0.0
  %393 = vmatprep.subr.mxu0 0.0
  %394 = vmatpush2.msra.mxu0 0.0
  %395 = vmatprep.subr.mxu0 0.0
  %396 = vmatpush2.msra.mxu0 0.0
  %397 = vmatprep.subr.mxu0 0.0
  %398 = vmatpush2.msra.mxu0 0.0
  %399 = vmatprep.subr.mxu0 0.0
  %400 = vmatpush2.msra.mxu0 0.0
  %401 = vmatprep.subr.mxu0 0.0
  %402 = vmatpush2.msra.mxu0 0.0
  %403 = vmatprep.subr.mxu0 0.0
  %404 = vmatpush2.msra.mxu0 0.0
  %405 = vmatprep.subr.mxu0 0.0
  %406 = vmatpush2.msra.mxu0 0.0
  %407 = vmatprep.subr.mxu0 0.0
  %408 = vmatpush2.msra.mxu0 0.0
  %409 = vmatprep.subr.mxu0 0.0
  %410 = vmatpush2.msra.mxu0 0.0
  %411 = vmatprep.mubr.f32.mxu0 0.0
  %412 = vmatmul.mubr.f32.gmra.mxu0 %v345
  %v413 = vpop.f32.mrf.mxu0
  %v414 = vadd.f32 %v341, %v413
  %v415 = vpop.f32.mrf.mxu0
  %416 = vdwg.mxu0
  %v418 = vlaneseq
  %v419 = vshrl.u32 %v418, 7
  %v420 = vsub.s32 0, %v419
  %v421 = vrot.slane %v265, %v420
  %v423 = vadd.f32 %v414, %v421
  %424 = vst.msk [vmem:[%s13] sm:$0xff] %vm190, %v423
  // Predicated region
  $region46: #{model_forward.2} parent=0 // pred_check
    _
  $region47: #{model_forward.2} parent=0 // pred_check_branch
    %426 = sbr.rel (0) target = $region49
  $region48: #{model_forward.2} parent=0 // pred_region
    _
  $region49: #{model_forward.2} parent=0 // pred_fallthru
    _
  // Predicated region
  $region50: #{model_forward.2} parent=0 // pred_check
    _
  $region51: #{model_forward.2} parent=0 // pred_check_branch
    %428 = sbr.rel (0) target = $region53
  $region52: #{model_forward.2} parent=0 // pred_region
    _
  $region53: #{model_forward.2} parent=0 // pred_fallthru
    _
  // Predicated region
  $region54: #{model_forward.2} parent=0 // pred_check
    _
  $region55: #{model_forward.2} parent=0 // pred_check_branch
    %430 = sbr.rel (0) target = $region57
  $region56: #{model_forward.2} parent=0 // pred_region
    _
  $region57: #{model_forward.2} parent=0 // pred_fallthru
    _
  // Predicated region
  $region58: #{model_forward.2} parent=0 // pred_check
    _
  $region59: #{model_forward.2} parent=0 // pred_check_branch
    %432 = sbr.rel (0) target = $region61
  $region60: #{model_forward.2} parent=0 // pred_region
    _
  $region61: #{model_forward.2} parent=0 // pred_fallthru
    _
  // Predicated region
  $region62: #{model_forward.2} parent=0 // pred_check
    _
  $region63: #{model_forward.2} parent=0 // pred_check_branch
    %434 = sbr.rel (0) target = $region65
  $region64: #{model_forward.2} parent=0 // pred_region
    _
  $region65: #{model_forward.2} parent=0 // pred_fallthru
    _
  // Predicated region
  $region66: #{model_forward.2} parent=0 // pred_check
    _
  $region67: #{model_forward.2} parent=0 // pred_check_branch
    %436 = sbr.rel (0) target = $region69
  $region68: #{model_forward.2} parent=0 // pred_region
    _
  $region69: #{model_forward.2} parent=0 // pred_fallthru
    _
  // Predicated region
  $region70: #{model_forward.2} parent=0 // pred_check
    _
  $region71: #{model_forward.2} parent=0 // pred_check_branch
    %438 = sbr.rel (0) target = $region73
  $region72: #{model_forward.2} parent=0 // pred_region
    _
  $region73: #{model_forward.2} parent=0 // pred_fallthru
    _
  // Predicated region
  $region74: #{model_forward.2} parent=0 // pred_check
    _
  $region75: #{model_forward.2} parent=0 // pred_check_branch
    %440 = sbr.rel (0) target = $region77
  $region76: #{model_forward.2} parent=0 // pred_region
    _
  $region77: #{model_forward.2} parent=0 // pred_fallthru
    _
  // Predicated region
  $region78: #{model_forward.2} parent=0 // pred_check
    _
  $region79: #{model_forward.2} parent=0 // pred_check_branch
    %442 = sbr.rel (0) target = $region81
  $region80: #{model_forward.2} parent=0 // pred_region
    _
  $region81: #{model_forward.2} parent=0 // pred_fallthru
    _
  // Predicated region
  $region82: #{model_forward.2} parent=0 // pred_check
    _
  $region83: #{model_forward.2} parent=0 // pred_check_branch
    %444 = sbr.rel (0) target = $region85
  $region84: #{model_forward.2} parent=0 // pred_region
    _
  $region85: #{model_forward.2} parent=0 // pred_fallthru
    _

// kernel: model_forward.3
$region0: #{model_forward.3}
  #allocation0 [shape = 'u32[]', space=smem, size = 0x4, offset = 0x4, fixed_abs, tag = 'smem constant byte address 0x4 - core index']
  #allocation1 [shape = 'u32[144,128]{1,0:T(1,128)}', space=vmem, size = 0x12000, scoped, tag = 'internal scratch']
  %s0 = inlined_call_operand.vmem [shape: f32[8,16], index: 0, kind: input, shape index: {}]
  %s1 = inlined_call_operand.vmem [shape: f32[8,18], index: 1, kind: input, shape index: {}]
  %s2 = inlined_call_operand.vmem [shape: f32[1,18], index: 2, kind: input, shape index: {}]
  %s3 = inlined_call_operand.vmem [shape: f32[8,8], index: 3, kind: input, shape index: {}]
  %s4 = inlined_call_operand.vmem [shape: f32[8,1], index: 4, kind: input, shape index: {}]
  %s5 = inlined_call_operand.vmem [shape: f32[8,1], index: 5, kind: input, shape index: {}]
  %s6 = inlined_call_operand.vmem [shape: f32[18,16], index: 6, kind: input, shape index: {}]
  %s7 = inlined_call_operand.vmem [shape: f32[16,264], index: 7, kind: input, shape index: {}]
  %s8 = inlined_call_operand.vmem [shape: f32[1,128], index: 8, kind: input, shape index: {}]
  %s9 = inlined_call_operand.vmem [shape: f32[1,128], index: 9, kind: input, shape index: {}]
  %s10 = inlined_call_operand.vmem [shape: f32[1,8], index: 10, kind: input, shape index: {}]
  %s11 = inlined_call_operand.vmem [shape: f32[128,8], index: 11, kind: input, shape index: {}]
  %s12 = inlined_call_operand.vmem [shape: f32[1,8], index: 12, kind: input, shape index: {}]
  %s13 = inlined_call_operand.vmem [shape: f32[1,8], index: 13, kind: input, shape index: {}]
  %s14 = inlined_call_operand.vmem [shape: f32[1,8], index: 14, kind: input, shape index: {}]
  %s15 = inlined_call_operand.hbm [shape: f32[8,8], index: 15, kind: output, shape index: {}]
  %s16 = sld [smem:[#allocation0]]
  $region70: #{model_forward.3} parent=0
    _
  %s18 = ssub.s32 1, %s16
  %s19 = scalar_select 0, %s18, %s16
  $region1: #{model_forward.3} parent=0
    #allocation2 [shape = 'u8[4096]{0}', space=vmem, size = 0x1000, scoped, tag = 'output window, operand 0, single buffered']
    #allocation3 [shape = 's32[1]{0}', space=sflag, size = 0x4, scoped, tag = 'scoped memory for model_forward.3']
    %20 = vsyncpa [#allocation3], 0
    // Predicated region
    $region2: #{model_forward.3} parent=1 // pred_check
      _
    $region3: #{model_forward.3} parent=1 // pred_check_branch
      %22 = sbr.rel (0) target = $region5
    $region4: #{model_forward.3} parent=1 // pred_region
      _
    $region5: #{model_forward.3} parent=1 // pred_fallthru
      _
    // Predicated region
    $region6: #{model_forward.3} parent=1 // pred_check
      _
    $region7: #{model_forward.3} parent=1 // pred_check_branch
      %24 = sbr.rel (0) target = $region9
    $region8: #{model_forward.3} parent=1 // pred_region
      _
    $region9: #{model_forward.3} parent=1 // pred_fallthru
      _
    // Predicated region
    $region10: #{model_forward.3} parent=1 // pred_check
      _
    $region11: #{model_forward.3} parent=1 // pred_check_branch
      %26 = sbr.rel (0) target = $region13
    $region12: #{model_forward.3} parent=1 // pred_region
      _
    $region13: #{model_forward.3} parent=1 // pred_fallthru
      _
    // Predicated region
    $region14: #{model_forward.3} parent=1 // pred_check
      _
    $region15: #{model_forward.3} parent=1 // pred_check_branch
      %28 = sbr.rel (0) target = $region17
    $region16: #{model_forward.3} parent=1 // pred_region
      _
    $region17: #{model_forward.3} parent=1 // pred_fallthru
      _
    // Predicated region
    $region18: #{model_forward.3} parent=1 // pred_check
      _
    $region19: #{model_forward.3} parent=1 // pred_check_branch
      %30 = sbr.rel (0) target = $region21
    $region20: #{model_forward.3} parent=1 // pred_region
      _
    $region21: #{model_forward.3} parent=1 // pred_fallthru
      _
    // Predicated region
    $region22: #{model_forward.3} parent=1 // pred_check
      _
    $region23: #{model_forward.3} parent=1 // pred_check_branch
      %32 = sbr.rel (0) target = $region25
    $region24: #{model_forward.3} parent=1 // pred_region
      _
    $region25: #{model_forward.3} parent=1 // pred_fallthru
      _
    // Predicated region
    $region26: #{model_forward.3} parent=1 // pred_check
      _
    $region27: #{model_forward.3} parent=1 // pred_check_branch
      %34 = sbr.rel (0) target = $region29
    $region28: #{model_forward.3} parent=1 // pred_region
      _
    $region29: #{model_forward.3} parent=1 // pred_fallthru
      _
    // Predicated region
    $region30: #{model_forward.3} parent=1 // pred_check
      _
    $region31: #{model_forward.3} parent=1 // pred_check_branch
      %36 = sbr.rel (0) target = $region33
    $region32: #{model_forward.3} parent=1 // pred_region
      _
    $region33: #{model_forward.3} parent=1 // pred_fallthru
      _
    // Predicated region
    $region34: #{model_forward.3} parent=1 // pred_check
      _
    $region35: #{model_forward.3} parent=1 // pred_check_branch
      %38 = sbr.rel (0) target = $region37
    $region36: #{model_forward.3} parent=1 // pred_region
      _
    $region37: #{model_forward.3} parent=1 // pred_fallthru
      _
    // Predicated region
    $region38: #{model_forward.3} parent=1 // pred_check
      _
    $region39: #{model_forward.3} parent=1 // pred_check_branch
      %40 = sbr.rel (0) target = $region41
    $region40: #{model_forward.3} parent=1 // pred_region
      _
    $region41: #{model_forward.3} parent=1 // pred_fallthru
      _
    // Predicated region
    $region42: #{model_forward.3} parent=1 // pred_check
      _
    $region43: #{model_forward.3} parent=1 // pred_check_branch
      %42 = sbr.rel (0) target = $region45
    $region44: #{model_forward.3} parent=1 // pred_region
      _
    $region45: #{model_forward.3} parent=1 // pred_fallthru
      _
    // Predicated region
    $region46: #{model_forward.3} parent=1 // pred_check
      _
    $region47: #{model_forward.3} parent=1 // pred_check_branch
      %44 = sbr.rel (0) target = $region49
    $region48: #{model_forward.3} parent=1 // pred_region
      _
    $region49: #{model_forward.3} parent=1 // pred_fallthru
      _
    // Predicated region
    $region50: #{model_forward.3} parent=1 // pred_check
      _
    $region51: #{model_forward.3} parent=1 // pred_check_branch
      %46 = sbr.rel (0) target = $region53
    $region52: #{model_forward.3} parent=1 // pred_region
      _
    $region53: #{model_forward.3} parent=1 // pred_fallthru
      _
    // Predicated region
    $region54: #{model_forward.3} parent=1 // pred_check
      _
    $region55: #{model_forward.3} parent=1 // pred_check_branch
      %48 = sbr.rel (0) target = $region57
    $region56: #{model_forward.3} parent=1 // pred_region
      _
    $region57: #{model_forward.3} parent=1 // pred_fallthru
      _
    // Predicated region
    $region58: #{model_forward.3} parent=1 // pred_check
      _
    $region59: #{model_forward.3} parent=1 // pred_check_branch
      %50 = sbr.rel (0) target = $region61
    $region60: #{model_forward.3} parent=1 // pred_region
      _
    $region61: #{model_forward.3} parent=1 // pred_fallthru
      _
    %v51 = vld [vmem:[%s1] sm:$0xff]
    %v52 = vld [vmem:[%s2] sm:$0x1]
    %v54 = vlaneseq
    %v55 = vshrl.u32 %v54, 7
    %v56 = vsub.s32 0, %v55
    %v57 = vrot.slane %v52, %v56
    %v59 = vmul.f32 %v51, %v57
    %v60 = vld [vmem:[%s6] sm:$0xff]
    %v61 = vld [vmem:[%s6 + $0x8] sm:$0xff]
    %v62 = vld [vmem:[%s6 + $0x10] sm:$0x3]
    %vm63 = vcmask 146432
    %v65 = vsel %vm63, %v59, 0
    %vm67 = vcmask 1041408
    %v69 = vsel %vm67, %v62, 0
    %71 = vmatprep.subr.mxu0 0.0
    %72 = vmatpush1.msra.mxu0 0.0
    %73 = vmatprep.subr.mxu0 0.0
    %74 = vmatpush1.msra.mxu0 0.0
    %75 = vmatprep.subr.mxu0 0.0
    %76 = vmatpush1.msra.mxu0 0.0
    %77 = vmatprep.subr.mxu0 0.0
    %78 = vmatpush1.msra.mxu0 0.0
    %79 = vmatprep.subr.mxu0 0.0
    %80 = vmatpush1.msra.mxu0 0.0
    %81 = vmatprep.subr.mxu0 0.0
    %82 = vmatpush1.msra.mxu0 0.0
    %83 = vmatprep.subr.mxu0 0.0
    %84 = vmatpush1.msra.mxu0 0.0
    %85 = vmatprep.subr.mxu0 0.0
    %86 = vmatpush1.msra.mxu0 0.0
    %87 = vmatprep.subr.mxu0 0.0
    %88 = vmatpush1.msra.mxu0 0.0
    %89 = vmatprep.subr.mxu0 0.0
    %90 = vmatpush1.msra.mxu0 0.0
    %91 = vmatprep.subr.mxu0 0.0
    %92 = vmatpush1.msra.mxu0 0.0
    %93 = vmatprep.subr.mxu0 0.0
    %94 = vmatpush1.msra.mxu0 0.0
    %95 = vmatprep.subr.mxu0 0.0
    %96 = vmatpush1.msra.mxu0 0.0
    %97 = vmatprep.subr.mxu0 0.0
    %98 = vmatpush1.msra.mxu0 %v69
    %99 = vmatprep.subr.mxu0 0.0
    %100 = vmatpush1.msra.mxu0 %v61
    %101 = vmatprep.subr.mxu0 0.0
    %102 = vmatpush1.msra.mxu0 %v60
    %103 = vmatprep.subr.mxu0 0.0
    %104 = vmatpush2.msra.mxu0 0.0
    %105 = vmatprep.subr.mxu0 0.0
    %106 = vmatpush2.msra.mxu0 0.0
    %107 = vmatprep.subr.mxu0 0.0
    %108 = vmatpush2.msra.mxu0 0.0
    %109 = vmatprep.subr.mxu0 0.0
    %110 = vmatpush2.msra.mxu0 0.0
    %111 = vmatprep.subr.mxu0 0.0
    %112 = vmatpush2.msra.mxu0 0.0
    %113 = vmatprep.subr.mxu0 0.0
    %114 = vmatpush2.msra.mxu0 0.0
    %115 = vmatprep.subr.mxu0 0.0
    %116 = vmatpush2.msra.mxu0 0.0
    %117 = vmatprep.subr.mxu0 0.0
    %118 = vmatpush2.msra.mxu0 0.0
    %119 = vmatprep.subr.mxu0 0.0
    %120 = vmatpush2.msra.mxu0 0.0
    %121 = vmatprep.subr.mxu0 0.0
    %122 = vmatpush2.msra.mxu0 0.0
    %123 = vmatprep.subr.mxu0 0.0
    %124 = vmatpush2.msra.mxu0 0.0
    %125 = vmatprep.subr.mxu0 0.0
    %126 = vmatpush2.msra.mxu0 0.0
    %127 = vmatprep.subr.mxu0 0.0
    %128 = vmatpush2.msra.mxu0 0.0
    %129 = vmatprep.subr.mxu0 0.0
    %130 = vmatpush2.msra.mxu0 0.0
    %131 = vmatprep.subr.mxu0 0.0
    %132 = vmatpush2.msra.mxu0 0.0
    %133 = vmatprep.subr.mxu0 0.0
    %134 = vmatpush2.msra.mxu0 0.0
    %135 = vmatprep.mubr.f32.mxu0 0.0
    %136 = vmatmul.mubr.f32.gmra.mxu0 %v65
    %v137 = vpop.f32.mrf.mxu0
    %v138 = vadd.f32 0.0, %v137
    %v139 = vpop.f32.mrf.mxu0
    %140 = vdwg.mxu0
    %v141 = vld [vmem:[%s0] sm:$0xff]
    %v142 = vmul.f32 %v141, %v138
    %v143 = vld [vmem:[%s7] sm:$0xff]
    %v144 = vld [vmem:[%s7 + $0x8] sm:$0xff]
    %v145 = vld [vmem:[%s7 + $0x10] sm:$0xff]
    %v146 = vld [vmem:[%s7 + $0x18] sm:$0xff]
    %v147 = vld [vmem:[%s7 + $0x20] sm:$0xff]
    %v148 = vld [vmem:[%s7 + $0x28] sm:$0xff]
    %vm149 = vcmask 130048
    %v151 = vsel %vm149, %v142, 0
    %153 = vmatprep.subr.mxu0 0.0
    %154 = vmatpush1.msra.mxu0 0.0
    %155 = vmatprep.subr.mxu0 0.0
    %156 = vmatpush1.msra.mxu0 0.0
    %157 = vmatprep.subr.mxu0 0.0
    %158 = vmatpush1.msra.mxu0 0.0
    %159 = vmatprep.subr.mxu0 0.0
    %160 = vmatpush1.msra.mxu0 0.0
    %161 = vmatprep.subr.mxu0 0.0
    %162 = vmatpush1.msra.mxu0 0.0
    %163 = vmatprep.subr.mxu0 0.0
    %164 = vmatpush1.msra.mxu0 0.0
    %165 = vmatprep.subr.mxu0 0.0
    %166 = vmatpush1.msra.mxu0 0.0
    %167 = vmatprep.subr.mxu0 0.0
    %168 = vmatpush1.msra.mxu0 0.0
    %169 = vmatprep.subr.mxu0 0.0
    %170 = vmatpush1.msra.mxu0 0.0
    %171 = vmatprep.subr.mxu0 0.0
    %172 = vmatpush1.msra.mxu0 0.0
    %173 = vmatprep.subr.mxu0 0.0
    %174 = vmatpush1.msra.mxu0 0.0
    %175 = vmatprep.subr.mxu0 0.0
    %176 = vmatpush1.msra.mxu0 0.0
    %177 = vmatprep.subr.mxu0 0.0
    %178 = vmatpush1.msra.mxu0 0.0
    %179 = vmatprep.subr.mxu0 0.0
    %180 = vmatpush1.msra.mxu0 0.0
    %181 = vmatprep.subr.mxu0 %v147
    %182 = vmatpush1.msra.mxu0 %v146
    %183 = vmatprep.subr.mxu0 %v144
    %184 = vmatpush1.msra.mxu0 %v143
    %185 = vmatprep.subr.mxu0 0.0
    %186 = vmatpush2.msra.mxu0 0.0
    %187 = vmatprep.subr.mxu0 0.0
    %188 = vmatpush2.msra.mxu0 0.0
    %189 = vmatprep.subr.mxu0 0.0
    %190 = vmatpush2.msra.mxu0 0.0
    %191 = vmatprep.subr.mxu0 0.0
    %192 = vmatpush2.msra.mxu0 0.0
    %193 = vmatprep.subr.mxu0 0.0
    %194 = vmatpush2.msra.mxu0 0.0
    %195 = vmatprep.subr.mxu0 0.0
    %196 = vmatpush2.msra.mxu0 0.0
    %197 = vmatprep.subr.mxu0 0.0
    %198 = vmatpush2.msra.mxu0 0.0
    %199 = vmatprep.subr.mxu0 0.0
    %200 = vmatpush2.msra.mxu0 0.0
    %201 = vmatprep.subr.mxu0 0.0
    %202 = vmatpush2.msra.mxu0 0.0
    %203 = vmatprep.subr.mxu0 0.0
    %204 = vmatpush2.msra.mxu0 0.0
    %205 = vmatprep.subr.mxu0 0.0
    %206 = vmatpush2.msra.mxu0 0.0
    %207 = vmatprep.subr.mxu0 0.0
    %208 = vmatpush2.msra.mxu0 0.0
    %209 = vmatprep.subr.mxu0 0.0
    %210 = vmatpush2.msra.mxu0 0.0
    %211 = vmatprep.subr.mxu0 0.0
    %212 = vmatpush2.msra.mxu0 0.0
    %213 = vmatprep.subr.mxu0 0.0
    %214 = vmatpush2.msra.mxu0 0.0
    %215 = vmatprep.subr.mxu0 0.0
    %216 = vmatpush2.msra.mxu0 0.0
    %217 = vmatprep.mubr.f32.mxu0 0.0
    %218 = vmatmul.mubr.f32.gmra.mxu0 %v151
    %v219 = vpop.f32.mrf.mxu0
    %v220 = vadd.f32 0.0, %v219
    %v221 = vpop.f32.mrf.mxu0
    %v222 = vadd.f32 0.0, %v221
    %223 = vdwg.mxu0
    %224 = vmatprep.subr.mxu0 0.0
    %225 = vmatpush1.msra.mxu0 0.0
    %226 = vmatprep.subr.mxu0 0.0
    %227 = vmatpush1.msra.mxu0 0.0
    %228 = vmatprep.subr.mxu0 0.0
    %229 = vmatpush1.msra.mxu0 0.0
    %230 = vmatprep.subr.mxu0 0.0
    %231 = vmatpush1.msra.mxu0 0.0
    %232 = vmatprep.subr.mxu0 0.0
    %233 = vmatpush1.msra.mxu0 0.0
    %234 = vmatprep.subr.mxu0 0.0
    %235 = vmatpush1.msra.mxu0 0.0
    %236 = vmatprep.subr.mxu0 0.0
    %237 = vmatpush1.msra.mxu0 0.0
    %238 = vmatprep.subr.mxu0 0.0
    %239 = vmatpush1.msra.mxu0 0.0
    %240 = vmatprep.subr.mxu0 0.0
    %241 = vmatpush1.msra.mxu0 0.0
    %242 = vmatprep.subr.mxu0 0.0
    %243 = vmatpush1.msra.mxu0 0.0
    %244 = vmatprep.subr.mxu0 0.0
    %245 = vmatpush1.msra.mxu0 0.0
    %246 = vmatprep.subr.mxu0 0.0
    %247 = vmatpush1.msra.mxu0 0.0
    %248 = vmatprep.subr.mxu0 0.0
    %249 = vmatpush1.msra.mxu0 0.0
    %250 = vmatprep.subr.mxu0 0.0
    %251 = vmatpush1.msra.mxu0 0.0
    %252 = vmatprep.subr.mxu0 0.0
    %253 = vmatpush1.msra.mxu0 %v148
    %254 = vmatprep.subr.mxu0 0.0
    %255 = vmatpush1.msra.mxu0 %v145
    %256 = vmatprep.subr.mxu0 0.0
    %257 = vmatpush2.msra.mxu0 0.0
    %258 = vmatprep.subr.mxu0 0.0
    %259 = vmatpush2.msra.mxu0 0.0
    %260 = vmatprep.subr.mxu0 0.0
    %261 = vmatpush2.msra.mxu0 0.0
    %262 = vmatprep.subr.mxu0 0.0
    %263 = vmatpush2.msra.mxu0 0.0
    %264 = vmatprep.subr.mxu0 0.0
    %265 = vmatpush2.msra.mxu0 0.0
    %266 = vmatprep.subr.mxu0 0.0
    %267 = vmatpush2.msra.mxu0 0.0
    %268 = vmatprep.subr.mxu0 0.0
    %269 = vmatpush2.msra.mxu0 0.0
    %270 = vmatprep.subr.mxu0 0.0
    %271 = vmatpush2.msra.mxu0 0.0
    %272 = vmatprep.subr.mxu0 0.0
    %273 = vmatpush2.msra.mxu0 0.0
    %274 = vmatprep.subr.mxu0 0.0
    %275 = vmatpush2.msra.mxu0 0.0
    %276 = vmatprep.subr.mxu0 0.0
    %277 = vmatpush2.msra.mxu0 0.0
    %278 = vmatprep.subr.mxu0 0.0
    %279 = vmatpush2.msra.mxu0 0.0
    %280 = vmatprep.subr.mxu0 0.0
    %281 = vmatpush2.msra.mxu0 0.0
    %282 = vmatprep.subr.mxu0 0.0
    %283 = vmatpush2.msra.mxu0 0.0
    %284 = vmatprep.subr.mxu0 0.0
    %285 = vmatpush2.msra.mxu0 0.0
    %286 = vmatprep.subr.mxu0 0.0
    %287 = vmatpush2.msra.mxu0 0.0
    %288 = vmatprep.mubr.f32.mxu0 0.0
    %289 = vmatmul.mubr.f32.gmra.mxu0 %v151
    %v290 = vpop.f32.mrf.mxu0
    %v291 = vadd.f32 0.0, %v290
    %v292 = vpop.f32.mrf.mxu0
    %293 = vdwg.mxu0
    %v294 = vld [vmem:[%s8] sm:$0x1]
    %v296 = vlaneseq
    %v297 = vshrl.u32 %v296, 7
    %v298 = vsub.s32 0, %v297
    %v299 = vrot.slane %v294, %v298
    %v301 = vadd.f32 %v220, %v299
    %v302 = vmul.f32 %v301, 0.5
    %v303 = vmul.f32 %v301, 0.044715
    %v304 = vmul.f32 %v303, %v301
    %v305 = vmul.f32 %v304, %v301
    %v306 = vadd.f32 %v301, %v305
    %v307 = vmul.f32 %v306, 0.7978846
    %v308 = vtanh.pop %v307
    %v309 = vadd.f32 %v308, 1.0
    %v310 = vmul.f32 %v302, %v309
    %v311 = vld [vmem:[%s9] sm:$0x1]
    %v313 = vlaneseq
    %v314 = vshrl.u32 %v313, 7
    %v315 = vsub.s32 0, %v314
    %v316 = vrot.slane %v311, %v315
    %v318 = vadd.f32 %v222, %v316
    %v319 = vld [vmem:[%s10] sm:$0x1]
    %v321 = vlaneseq
    %v322 = vshrl.u32 %v321, 7
    %v323 = vsub.s32 0, %v322
    %v324 = vrot.slane %v319, %v323
    %v326 = vadd.f32 %v291, %v324
    %v327 = vmul.f32 %v310, %v318
    %v328 = vld [vmem:[%s11] sm:$0xff]
    %v329 = vld [vmem:[%s11 + $0x8] sm:$0xff]
    %v330 = vld [vmem:[%s11 + $0x10] sm:$0xff]
    %v331 = vld [vmem:[%s11 + $0x18] sm:$0xff]
    %v332 = vld [vmem:[%s11 + $0x20] sm:$0xff]
    %v333 = vld [vmem:[%s11 + $0x28] sm:$0xff]
    %v334 = vld [vmem:[%s11 + $0x30] sm:$0xff]
    %v335 = vld [vmem:[%s11 + $0x38] sm:$0xff]
    %v336 = vld [vmem:[%s11 + $0x40] sm:$0xff]
    %v337 = vld [vmem:[%s11 + $0x48] sm:$0xff]
    %v338 = vld [vmem:[%s11 + $0x50] sm:$0xff]
    %v339 = vld [vmem:[%s11 + $0x58] sm:$0xff]
    %v340 = vld [vmem:[%s11 + $0x60] sm:$0xff]
    %v341 = vld [vmem:[%s11 + $0x68] sm:$0xff]
    %v342 = vld [vmem:[%s11 + $0x70] sm:$0xff]
    %v343 = vld [vmem:[%s11 + $0x78] sm:$0xff]
    %v344 = vld [vmem:[%s12] sm:$0x1]
    %v346 = vlaneseq
    %v347 = vshrl.u32 %v346, 7
    %v348 = vsub.s32 0, %v347
    %v349 = vrot.slane %v344, %v348
    %351 = vmatprep.subr.mxu0 0.0
    %352 = vmatpush1.msra.mxu0 %v343
    %353 = vmatprep.subr.mxu0 0.0
    %354 = vmatpush1.msra.mxu0 %v342
    %355 = vmatprep.subr.mxu0 0.0
    %356 = vmatpush1.msra.mxu0 %v341
    %357 = vmatprep.subr.mxu0 0.0
    %358 = vmatpush1.msra.mxu0 %v340
    %359 = vmatprep.subr.mxu0 0.0
    %360 = vmatpush1.msra.mxu0 %v339
    %361 = vmatprep.subr.mxu0 0.0
    %362 = vmatpush1.msra.mxu0 %v338
    %363 = vmatprep.subr.mxu0 0.0
    %364 = vmatpush1.msra.mxu0 %v337
    %365 = vmatprep.subr.mxu0 0.0
    %366 = vmatpush1.msra.mxu0 %v336
    %367 = vmatprep.subr.mxu0 0.0
    %368 = vmatpush1.msra.mxu0 %v335
    %369 = vmatprep.subr.mxu0 0.0
    %370 = vmatpush1.msra.mxu0 %v334
    %371 = vmatprep.subr.mxu0 0.0
    %372 = vmatpush1.msra.mxu0 %v333
    %373 = vmatprep.subr.mxu0 0.0
    %374 = vmatpush1.msra.mxu0 %v332
    %375 = vmatprep.subr.mxu0 0.0
    %376 = vmatpush1.msra.mxu0 %v331
    %377 = vmatprep.subr.mxu0 0.0
    %378 = vmatpush1.msra.mxu0 %v330
    %379 = vmatprep.subr.mxu0 0.0
    %380 = vmatpush1.msra.mxu0 %v329
    %381 = vmatprep.subr.mxu0 0.0
    %382 = vmatpush1.msra.mxu0 %v328
    %383 = vmatprep.subr.mxu0 0.0
    %384 = vmatpush2.msra.mxu0 0.0
    %385 = vmatprep.subr.mxu0 0.0
    %386 = vmatpush2.msra.mxu0 0.0
    %387 = vmatprep.subr.mxu0 0.0
    %388 = vmatpush2.msra.mxu0 0.0
    %389 = vmatprep.subr.mxu0 0.0
    %390 = vmatpush2.msra.mxu0 0.0
    %391 = vmatprep.subr.mxu0 0.0
    %392 = vmatpush2.msra.mxu0 0.0
    %393 = vmatprep.subr.mxu0 0.0
    %394 = vmatpush2.msra.mxu0 0.0
    %395 = vmatprep.subr.mxu0 0.0
    %396 = vmatpush2.msra.mxu0 0.0
    %397 = vmatprep.subr.mxu0 0.0
    %398 = vmatpush2.msra.mxu0 0.0
    %399 = vmatprep.subr.mxu0 0.0
    %400 = vmatpush2.msra.mxu0 0.0
    %401 = vmatprep.subr.mxu0 0.0
    %402 = vmatpush2.msra.mxu0 0.0
    %403 = vmatprep.subr.mxu0 0.0
    %404 = vmatpush2.msra.mxu0 0.0
    %405 = vmatprep.subr.mxu0 0.0
    %406 = vmatpush2.msra.mxu0 0.0
    %407 = vmatprep.subr.mxu0 0.0
    %408 = vmatpush2.msra.mxu0 0.0
    %409 = vmatprep.subr.mxu0 0.0
    %410 = vmatpush2.msra.mxu0 0.0
    %411 = vmatprep.subr.mxu0 0.0
    %412 = vmatpush2.msra.mxu0 0.0
    %413 = vmatprep.subr.mxu0 0.0
    %414 = vmatpush2.msra.mxu0 0.0
    %415 = vmatprep.mubr.f32.mxu0 0.0
    %416 = vmatmul.mubr.f32.gmra.mxu0 %v327
    %v417 = vpop.f32.mrf.mxu0
    %v418 = vadd.f32 %v349, %v417
    %v419 = vpop.f32.mrf.mxu0
    %420 = vdwg.mxu0
    %v421 = vmul.f32 %v418, 0.5
    %v422 = vmul.f32 %v418, 0.044715
    %v423 = vmul.f32 %v422, %v418
    %v424 = vmul.f32 %v423, %v418
    %v425 = vadd.f32 %v418, %v424
    %v426 = vmul.f32 %v425, 0.7978846
    %v427 = vtanh.pop %v426
    %v428 = vadd.f32 %v427, 1.0
    %v429 = vmul.f32 %v421, %v428
    %vm430 = vcmask 64512
    %v431 = vsel %vm430, %v429, 0.0
    %432 = vadd.xlane.f32.xlu0 %v431
    %v433 = vpop.xlane.xlu0 %432
    %v434 = vrcp.pop 8.0
    %v435 = vmul.f32 %v433, %v434
    %v436 = vsub.f32 %v429, %v435
    %v437 = vmul.f32 %v436, %v436
    %v438 = vsel %vm430, %v437, 0.0
    %439 = vadd.xlane.f32.xlu0 %v438
    %v440 = vpop.xlane.xlu0 %439
    %v441 = vmul.f32 %v440, %v434
    %v442 = vadd.f32 %v441, 1e-05
    %v443 = vrsqrt.pop %v442
    %v444 = vmul.f32 %v436, %v443
    %v445 = vld [vmem:[%s13] sm:$0x1]
    %v447 = vlaneseq
    %v448 = vshrl.u32 %v447, 7
    %v449 = vsub.s32 0, %v448
    %v450 = vrot.slane %v445, %v449
    %v452 = vmul.f32 %v444, %v450
    %v453 = vld [vmem:[%s14] sm:$0x1]
    %v455 = vlaneseq
    %v456 = vshrl.u32 %v455, 7
    %v457 = vsub.s32 0, %v456
    %v458 = vrot.slane %v453, %v457
    %v460 = vadd.f32 %v452, %v458
    %v461 = vadd.f32 %v326, %v460
    %v462 = vld [vmem:[%s3] sm:$0xff]
    %v463 = vmul.f32 %v462, %v461
    %v464 = vld [vmem:[%s4] sm:$0xff]
    %466 = vset.pattern.permute.xlu0 0
    %467 = vperm.xlu0 %466, %v464
    %v468 = vpop.permute.xlu0 %467
    %v470 = vmul.f32 %v463, %v468
    %v471 = vld [vmem:[%s5] sm:$0xff]
    %473 = vset.pattern.permute.xlu0 0
    %474 = vperm.xlu0 %473, %v471
    %v475 = vpop.permute.xlu0 %474
    %v477 = vadd.f32 %v470, %v475
    %478 = vst.msk [vmem:[#allocation2] sm:$0xff] %vm430, %v477
    // Predicated region
    $region62: #{model_forward.3} parent=1 // pred_check
      _
    $region63: #{model_forward.3} parent=1 // pred_check_branch
      %480 = sbr.rel (0) target = $region65
    $region64: #{model_forward.3} parent=1 // pred_region
      %s482 = ssub.s32 128, 128
      %483 = vsyncadd [#allocation3], %s482
      %s485 = sshll.u32 [#allocation2], 4
      %s486 = int_to_ptr.vmem [resolvable:$true] %s485
      %488 = dma.vmem_to_hbm [thread:$0]  %s486, 128, %s15, [#allocation3]
    $region65: #{model_forward.3} parent=1 // pred_fallthru
      _
    // Predicated region
    $region66: #{model_forward.3} parent=1 // pred_check
      _
    $region67: #{model_forward.3} parent=1 // pred_check_branch
      %490 = sbr.rel (0) target = $region69
    $region68: #{model_forward.3} parent=1 // pred_region
      %491 = dma.done [#allocation3], 128
    $region69: #{model_forward.3} parent=1 // pred_fallthru
      _
    %492 = vsyncpa [#allocation3], 1

</llo_original>
